<compile_context>
chip_gen: v7x
topology: tpu7x:2x2x1
jax: 0.10.0
libtpu: 0.0.40
codegen_flags: <defaults>
</compile_context>

<pallas_src>
import jax
import jax.numpy as jnp
from jax import lax
from jax.experimental import pallas as pl
from jax.experimental.pallas import tpu as pltpu


def _round_up(x, m):
    return ((x + m - 1) // m) * m


# ---------------------------------------------------------------------------
# Kernel 1: fused node MLPs + Lambda multiply for ALL relations (R unrolled).
#   For each relation r:  z_r = tanh(tanh(x @ W1_r + b1_r) @ W2_r + b2_r)
#                         w_r = z_r @ Lambda_r
#   Outputs concatenated along features: z_all, w_all : (tile, R*Ld)
# ---------------------------------------------------------------------------
def _node_transform_kernel(x_ref, w1_ref, b1_ref, w2_ref, b2_ref, lam_ref,
                           z_ref, w_ref):
    x = x_ref[...]                                   # (tile, in_dim) f32
    num_rel = w1_ref.shape[0]                        # static -> python unroll
    zs, ws = [], []
    for r in range(num_rel):
        h1 = jnp.tanh(
            jnp.dot(x, w1_ref[r], preferred_element_type=jnp.float32)
            + b1_ref[r])
        z = jnp.tanh(
            jnp.dot(h1, w2_ref[r], preferred_element_type=jnp.float32)
            + b2_ref[r])
        w = jnp.dot(z, lam_ref[r], preferred_element_type=jnp.float32)
        zs.append(z)
        ws.append(w)
    z_ref[...] = jnp.concatenate(zs, axis=-1).astype(z_ref.dtype)
    w_ref[...] = jnp.concatenate(ws, axis=-1).astype(w_ref.dtype)


# ---------------------------------------------------------------------------
# Kernel 2: adj block (i, j) = w_all[i-block] @ z_all[j-block]^T
#   Single last-dim contraction over K = R*Ld (relation sum folded into K),
#   no transpose, no accumulator scratch, direct lane-dense output write.
# ---------------------------------------------------------------------------
def _sbm_decode_kernel(w_ref, z_ref, adj_ref):
    adj_ref[...] = lax.dot_general(
        w_ref[...], z_ref[...],
        dimension_numbers=(((1,), (1,)), ((), ())),   # contract last dims
        preferred_element_type=jnp.float32).astype(adj_ref.dtype)


def multilatent_sbm_decoder(x, w1, b1, w2, b2, lam, *, tile=1024,
                            intermediate_dtype=jnp.bfloat16, out_dtype=None):
    """Forward pass of MultiLatetnt_SBM_decoder.

    x   : (N, in_dim)
    w1  : (R, in_dim, H)    b1 : (R, H)
    w2  : (R, H, Ld)        b2 : (R, Ld)
    lam : (R, Ld, Ld)
    returns adj : (N, N) = sum_r z_r @ Lambda_r @ z_r.T
    """
    N, in_dim = x.shape
    R, _, H = w1.shape
    Ld = w2.shape[-1]
    K = R * Ld
    out_dtype = x.dtype if out_dtype is None else out_dtype

    # Pad N only to a multiple of 128, then pick the largest lane-dense tile
    # (multiple of 128) that divides the padded size.
    n_pad = _round_up(N, 128)
    tile = max(128, min((int(tile) // 128) * 128, n_pad))
    while n_pad % tile:
        tile -= 128

    x_p = jnp.pad(x, ((0, n_pad - N), (0, 0))) if n_pad != N else x
    # Reshape biases so their blocks satisfy the (sublane, lane) tiling rule.
    b1r = b1.reshape(R, 1, H)
    b2r = b2.reshape(R, 1, Ld)

    # ---- Kernel 1: z_all / w_all = [z_r | ...], [z_r @ Lambda_r | ...] -----
    z_all, w_all = pl.pallas_call(
        _node_transform_kernel,
        out_shape=(jax.ShapeDtypeStruct((n_pad, K), intermediate_dtype),
                   jax.ShapeDtypeStruct((n_pad, K), intermediate_dtype)),
        grid_spec=pltpu.PrefetchScalarGridSpec(
            num_scalar_prefetch=0,
            grid=(n_pad // tile,),
            in_specs=[
                pl.BlockSpec((tile, in_dim), lambda i: (i, 0)),
                pl.BlockSpec((R, in_dim, H), lambda i: (0, 0, 0)),
                pl.BlockSpec((R, 1, H), lambda i: (0, 0, 0)),
                pl.BlockSpec((R, H, Ld), lambda i: (0, 0, 0)),
                pl.BlockSpec((R, 1, Ld), lambda i: (0, 0, 0)),
                pl.BlockSpec((R, Ld, Ld), lambda i: (0, 0, 0)),
            ],
            out_specs=[
                pl.BlockSpec((tile, K), lambda i: (i, 0)),
                pl.BlockSpec((tile, K), lambda i: (i, 0)),
            ],
        ),
        compiler_params=pltpu.CompilerParams(
            dimension_semantics=("parallel",)),
    )(x_p, w1, b1r, w2, b2r, lam)

    # ---- Kernel 2: adj = w_all @ z_all.T (relation sum folded into K) ------
    adj_p = pl.pallas_call(
        _sbm_decode_kernel,
        out_shape=jax.ShapeDtypeStruct((n_pad, n_pad), out_dtype),
        grid_spec=pltpu.PrefetchScalarGridSpec(
            num_scalar_prefetch=0,
            grid=(n_pad // tile, n_pad // tile),
            in_specs=[
                pl.BlockSpec((tile, K), lambda i, j: (i, 0)),   # w rows i
                pl.BlockSpec((tile, K), lambda i, j: (j, 0)),   # z rows j
            ],
            out_specs=pl.BlockSpec((tile, tile), lambda i, j: (i, j)),
        ),
        compiler_params=pltpu.CompilerParams(
            dimension_semantics=("parallel", "parallel"),
            vmem_limit_bytes=32 * 1024 * 1024),
    )(w_all, z_all)

    if n_pad != N:
        adj_p = adj_p[:N, :N]
    return adj_p


if __name__ == "__main__":
    key = jax.random.PRNGKey(0)

    # Small shapes consistent with the module:
    # number_of_rel=2, node_trns_layers=[32], Lambda_dim=16, in_dim=32, N=200
    R, Ld, in_dim, H, N = 2, 16, 32, 32, 200

    ks = jax.random.split(key, 6)
    x = jax.random.normal(ks[0], (N, in_dim), dtype=jnp.float32)
    w1 = jax.random.normal(ks[1], (R, in_dim, H), jnp.float32) / jnp.sqrt(in_dim)
    b1 = 0.1 * jax.random.normal(ks[2], (R, H), jnp.float32)
    w2 = jax.random.normal(ks[3], (R, H, Ld), jnp.float32) / jnp.sqrt(H)
    b2 = 0.1 * jax.random.normal(ks[4], (R, Ld), jnp.float32)
    lam = jax.random.normal(ks[5], (R, Ld, Ld), jnp.float32) / jnp.sqrt(Ld)

    adj = multilatent_sbm_decoder(x, w1, b1, w2, b2, lam)
    jax.block_until_ready(adj)
    assert adj.shape == (N, N)

    # Pure-JAX reference of the same forward pass, with the same bf16 rounding
    # of the intermediates (z_r and z_r @ Lambda_r) the kernel applies.
    ref = jnp.zeros((N, N), jnp.float32)
    for r in range(R):
        z = jnp.tanh(jnp.tanh(x @ w1[r] + b1[r]) @ w2[r] + b2[r])
        w = z @ lam[r]
        zb = z.astype(jnp.bfloat16).astype(jnp.float32)
        wb = w.astype(jnp.bfloat16).astype(jnp.float32)
        ref = ref + wb @ zb.T

    err = float(jnp.max(jnp.abs(adj - ref)))
    assert err < 2e-2, err

    print("KERNEL_OK")
</pallas_src>

<mosaic_0001>
module attributes {stable_mosaic.version = 11 : i64} {
  func.func @_node_transform_kernel(%arg0: i32, %arg1: memref<256x32xf32, #tpu.memory_space<vmem>>, %arg2: memref<2x32x32xf32, #tpu.memory_space<vmem>>, %arg3: memref<2x1x32xf32, #tpu.memory_space<vmem>>, %arg4: memref<2x32x16xf32, #tpu.memory_space<vmem>>, %arg5: memref<2x1x16xf32, #tpu.memory_space<vmem>>, %arg6: memref<2x16x16xf32, #tpu.memory_space<vmem>>, %arg7: memref<256x32xbf16, #tpu.memory_space<vmem>>, %arg8: memref<256x32xbf16, #tpu.memory_space<vmem>>) attributes {dimension_semantics = [#tpu.dimension_semantics<parallel>], iteration_bounds = array<i64: 1>, scalar_prefetch = 0 : i64, scratch_operands = 0 : i64, tpu.core_type = #tpu.core_type<tc>, window_params = [{transform_indices = @transform_0, window_bounds = array<i64: 256, 32>}, {pipeline_mode = #tpu.pipeline_mode<synchronous>, transform_indices = @transform_1, window_bounds = array<i64: 2, 32, 32>}, {pipeline_mode = #tpu.pipeline_mode<synchronous>, transform_indices = @transform_2, window_bounds = array<i64: 2, 1, 32>}, {pipeline_mode = #tpu.pipeline_mode<synchronous>, transform_indices = @transform_3, window_bounds = array<i64: 2, 32, 16>}, {pipeline_mode = #tpu.pipeline_mode<synchronous>, transform_indices = @transform_4, window_bounds = array<i64: 2, 1, 16>}, {pipeline_mode = #tpu.pipeline_mode<synchronous>, transform_indices = @transform_5, window_bounds = array<i64: 2, 16, 16>}, {transform_indices = @transform_6, window_bounds = array<i64: 256, 32>}, {transform_indices = @transform_7, window_bounds = array<i64: 256, 32>}]} {
    %c0 = arith.constant 0 : index
    %c0_0 = arith.constant 0 : index
    %0 = vector.load %arg1[%c0, %c0_0] : memref<256x32xf32, #tpu.memory_space<vmem>>, vector<256x32xf32>
    %c0_1 = arith.constant 0 : index
    %c0_2 = arith.constant 0 : index
    %c0_3 = arith.constant 0 : index
    %1 = vector.load %arg2[%c0_1, %c0_2, %c0_3] : memref<2x32x32xf32, #tpu.memory_space<vmem>>, vector<1x32x32xf32>
    %2 = vector.shape_cast %1 : vector<1x32x32xf32> to vector<32x32xf32>
    %cst = arith.constant dense<0.000000e+00> : vector<256x32xf32>
    %3 = tpu.matmul %0, %2, %cst {dimension_numbers = #tpu.dot_dimension_numbers<[1], [0], [0], [1], [0, 0, 1, 1], [], []>} : vector<256x32xf32>, vector<32x32xf32>, vector<256x32xf32> -> vector<256x32xf32>
    %c0_4 = arith.constant 0 : index
    %c0_5 = arith.constant 0 : index
    %c0_6 = arith.constant 0 : index
    %4 = vector.load %arg3[%c0_4, %c0_5, %c0_6] : memref<2x1x32xf32, #tpu.memory_space<vmem>>, vector<1x1x32xf32>
    %5 = vector.shape_cast %4 : vector<1x1x32xf32> to vector<1x32xf32>
    %6 = vector.broadcast %5 : vector<1x32xf32> to vector<256x32xf32>
    %7 = arith.addf %3, %6 : vector<256x32xf32>
    %8 = math.tanh %7 : vector<256x32xf32>
    %c0_7 = arith.constant 0 : index
    %c0_8 = arith.constant 0 : index
    %c0_9 = arith.constant 0 : index
    %9 = vector.load %arg4[%c0_7, %c0_8, %c0_9] : memref<2x32x16xf32, #tpu.memory_space<vmem>>, vector<1x32x16xf32>
    %10 = vector.shape_cast %9 : vector<1x32x16xf32> to vector<32x16xf32>
    %cst_10 = arith.constant dense<0.000000e+00> : vector<256x16xf32>
    %11 = tpu.matmul %8, %10, %cst_10 {dimension_numbers = #tpu.dot_dimension_numbers<[1], [0], [0], [1], [0, 0, 1, 1], [], []>} : vector<256x32xf32>, vector<32x16xf32>, vector<256x16xf32> -> vector<256x16xf32>
    %c0_11 = arith.constant 0 : index
    %c0_12 = arith.constant 0 : index
    %c0_13 = arith.constant 0 : index
    %12 = vector.load %arg5[%c0_11, %c0_12, %c0_13] : memref<2x1x16xf32, #tpu.memory_space<vmem>>, vector<1x1x16xf32>
    %13 = vector.shape_cast %12 : vector<1x1x16xf32> to vector<1x16xf32>
    %14 = vector.broadcast %13 : vector<1x16xf32> to vector<256x16xf32>
    %15 = arith.addf %11, %14 : vector<256x16xf32>
    %16 = math.tanh %15 : vector<256x16xf32>
    %c0_14 = arith.constant 0 : index
    %c0_15 = arith.constant 0 : index
    %c0_16 = arith.constant 0 : index
    %17 = vector.load %arg6[%c0_14, %c0_15, %c0_16] : memref<2x16x16xf32, #tpu.memory_space<vmem>>, vector<1x16x16xf32>
    %18 = vector.shape_cast %17 : vector<1x16x16xf32> to vector<16x16xf32>
    %cst_17 = arith.constant dense<0.000000e+00> : vector<256x16xf32>
    %19 = tpu.matmul %16, %18, %cst_17 {dimension_numbers = #tpu.dot_dimension_numbers<[1], [0], [0], [1], [0, 0, 1, 1], [], []>} : vector<256x16xf32>, vector<16x16xf32>, vector<256x16xf32> -> vector<256x16xf32>
    %c1 = arith.constant 1 : index
    %c0_18 = arith.constant 0 : index
    %c0_19 = arith.constant 0 : index
    %20 = vector.load %arg2[%c1, %c0_18, %c0_19] : memref<2x32x32xf32, #tpu.memory_space<vmem>>, vector<1x32x32xf32>
    %21 = vector.shape_cast %20 : vector<1x32x32xf32> to vector<32x32xf32>
    %cst_20 = arith.constant dense<0.000000e+00> : vector<256x32xf32>
    %22 = tpu.matmul %0, %21, %cst_20 {dimension_numbers = #tpu.dot_dimension_numbers<[1], [0], [0], [1], [0, 0, 1, 1], [], []>} : vector<256x32xf32>, vector<32x32xf32>, vector<256x32xf32> -> vector<256x32xf32>
    %c1_21 = arith.constant 1 : index
    %c0_22 = arith.constant 0 : index
    %c0_23 = arith.constant 0 : index
    %23 = vector.load %arg3[%c1_21, %c0_22, %c0_23] : memref<2x1x32xf32, #tpu.memory_space<vmem>>, vector<1x1x32xf32>
    %24 = vector.shape_cast %23 : vector<1x1x32xf32> to vector<1x32xf32>
    %25 = vector.broadcast %24 : vector<1x32xf32> to vector<256x32xf32>
    %26 = arith.addf %22, %25 : vector<256x32xf32>
    %27 = math.tanh %26 : vector<256x32xf32>
    %c1_24 = arith.constant 1 : index
    %c0_25 = arith.constant 0 : index
    %c0_26 = arith.constant 0 : index
    %28 = vector.load %arg4[%c1_24, %c0_25, %c0_26] : memref<2x32x16xf32, #tpu.memory_space<vmem>>, vector<1x32x16xf32>
    %29 = vector.shape_cast %28 : vector<1x32x16xf32> to vector<32x16xf32>
    %cst_27 = arith.constant dense<0.000000e+00> : vector<256x16xf32>
    %30 = tpu.matmul %27, %29, %cst_27 {dimension_numbers = #tpu.dot_dimension_numbers<[1], [0], [0], [1], [0, 0, 1, 1], [], []>} : vector<256x32xf32>, vector<32x16xf32>, vector<256x16xf32> -> vector<256x16xf32>
    %c1_28 = arith.constant 1 : index
    %c0_29 = arith.constant 0 : index
    %c0_30 = arith.constant 0 : index
    %31 = vector.load %arg5[%c1_28, %c0_29, %c0_30] : memref<2x1x16xf32, #tpu.memory_space<vmem>>, vector<1x1x16xf32>
    %32 = vector.shape_cast %31 : vector<1x1x16xf32> to vector<1x16xf32>
    %33 = vector.broadcast %32 : vector<1x16xf32> to vector<256x16xf32>
    %34 = arith.addf %30, %33 : vector<256x16xf32>
    %35 = math.tanh %34 : vector<256x16xf32>
    %c1_31 = arith.constant 1 : index
    %c0_32 = arith.constant 0 : index
    %c0_33 = arith.constant 0 : index
    %36 = vector.load %arg6[%c1_31, %c0_32, %c0_33] : memref<2x16x16xf32, #tpu.memory_space<vmem>>, vector<1x16x16xf32>
    %37 = vector.shape_cast %36 : vector<1x16x16xf32> to vector<16x16xf32>
    %cst_34 = arith.constant dense<0.000000e+00> : vector<256x16xf32>
    %38 = tpu.matmul %35, %37, %cst_34 {dimension_numbers = #tpu.dot_dimension_numbers<[1], [0], [0], [1], [0, 0, 1, 1], [], []>} : vector<256x16xf32>, vector<16x16xf32>, vector<256x16xf32> -> vector<256x16xf32>
    %39 = tpu.concatenate %16, %35 in 1 : vector<256x16xf32>, vector<256x16xf32> -> vector<256x32xf32>
    %40 = arith.truncf %39 : vector<256x32xf32> to vector<256x32xbf16>
    %c0_35 = arith.constant 0 : index
    %c0_36 = arith.constant 0 : index
    %41 = vector.load %arg7[%c0_35, %c0_36] : memref<256x32xbf16, #tpu.memory_space<vmem>>, vector<256x32xbf16>
    tpu.vector_store %arg7[%c0_35, %c0_36], %40 {strides = array<i32>} : memref<256x32xbf16, #tpu.memory_space<vmem>>, vector<256x32xbf16>,
    %42 = tpu.concatenate %19, %38 in 1 : vector<256x16xf32>, vector<256x16xf32> -> vector<256x32xf32>
    %43 = arith.truncf %42 : vector<256x32xf32> to vector<256x32xbf16>
    %c0_37 = arith.constant 0 : index
    %c0_38 = arith.constant 0 : index
    %44 = vector.load %arg8[%c0_37, %c0_38] : memref<256x32xbf16, #tpu.memory_space<vmem>>, vector<256x32xbf16>
    tpu.vector_store %arg8[%c0_37, %c0_38], %43 {strides = array<i32>} : memref<256x32xbf16, #tpu.memory_space<vmem>>, vector<256x32xbf16>,
    return
  }
  func.func @transform_0(%arg0: i32) -> (i32, i32) {
    %c0_i32 = arith.constant 0 : i32
    %c0_i32_0 = arith.constant 0 : i32
    return %arg0, %c0_i32 : i32, i32
  }
  func.func @transform_1(%arg0: i32) -> (i32, i32, i32) {
    %c0_i32 = arith.constant 0 : i32
    %c0_i32_0 = arith.constant 0 : i32
    %c0_i32_1 = arith.constant 0 : i32
    %c0_i32_2 = arith.constant 0 : i32
    return %c0_i32, %c0_i32_0, %c0_i32_1 : i32, i32, i32
  }
  func.func @transform_2(%arg0: i32) -> (i32, i32, i32) {
    %c0_i32 = arith.constant 0 : i32
    %c0_i32_0 = arith.constant 0 : i32
    %c0_i32_1 = arith.constant 0 : i32
    %c0_i32_2 = arith.constant 0 : i32
    return %c0_i32, %c0_i32_0, %c0_i32_1 : i32, i32, i32
  }
  func.func @transform_3(%arg0: i32) -> (i32, i32, i32) {
    %c0_i32 = arith.constant 0 : i32
    %c0_i32_0 = arith.constant 0 : i32
    %c0_i32_1 = arith.constant 0 : i32
    %c0_i32_2 = arith.constant 0 : i32
    return %c0_i32, %c0_i32_0, %c0_i32_1 : i32, i32, i32
  }
  func.func @transform_4(%arg0: i32) -> (i32, i32, i32) {
    %c0_i32 = arith.constant 0 : i32
    %c0_i32_0 = arith.constant 0 : i32
    %c0_i32_1 = arith.constant 0 : i32
    %c0_i32_2 = arith.constant 0 : i32
    return %c0_i32, %c0_i32_0, %c0_i32_1 : i32, i32, i32
  }
  func.func @transform_5(%arg0: i32) -> (i32, i32, i32) {
    %c0_i32 = arith.constant 0 : i32
    %c0_i32_0 = arith.constant 0 : i32
    %c0_i32_1 = arith.constant 0 : i32
    %c0_i32_2 = arith.constant 0 : i32
    return %c0_i32, %c0_i32_0, %c0_i32_1 : i32, i32, i32
  }
  func.func @transform_6(%arg0: i32) -> (i32, i32) {
    %c0_i32 = arith.constant 0 : i32
    %c0_i32_0 = arith.constant 0 : i32
    return %arg0, %c0_i32 : i32, i32
  }
  func.func @transform_7(%arg0: i32) -> (i32, i32) {
    %c0_i32 = arith.constant 0 : i32
    %c0_i32_0 = arith.constant 0 : i32
    return %arg0, %c0_i32 : i32, i32
  }
}

</mosaic_0001>

<llo_original>
// kernel: tpu_custom_call.1
$region0: #{tpu_custom_call.1}
  #allocation0 [shape = 'u32[]', space=smem, size = 0x4, offset = 0x4, fixed_abs, tag = 'smem constant byte address 0x4 - core index']
  #allocation1 [shape = 'u32[144,128]{1,0:T(1,128)}', space=vmem, size = 0x12000, scoped, tag = 'internal scratch']
  %s0 = inlined_call_operand.vmem [shape: f32[256,32], index: 0, kind: input, shape index: {}]
  %s1 = inlined_call_operand.vmem [shape: f32[2,32,32], index: 1, kind: input, shape index: {}]
  %s2 = inlined_call_operand.vmem [shape: f32[2,1,32], index: 2, kind: input, shape index: {}]
  %s3 = inlined_call_operand.vmem [shape: f32[2,32,16], index: 3, kind: input, shape index: {}]
  %s4 = inlined_call_operand.vmem [shape: f32[2,1,16], index: 4, kind: input, shape index: {}]
  %s5 = inlined_call_operand.vmem [shape: f32[2,16,16], index: 5, kind: input, shape index: {}]
  %s6 = inlined_call_operand.vmem [shape: bf16[256,32], index: 6, kind: output, shape index: {0}]
  %s7 = inlined_call_operand.vmem [shape: bf16[256,32], index: 7, kind: output, shape index: {1}]
  %8 = xla_tuple %s6, %s7
  %s9 = sld [smem:[#allocation0]]
  $region42: #{tpu_custom_call.1} parent=0
    _
  %s11 = ssub.s32 1, %s9
  %s12 = scalar_select 0, %s11, %s9
  // Predicated region
  $region2: #{tpu_custom_call.1} parent=0 // pred_check
    _
  $region3: #{tpu_custom_call.1} parent=0 // pred_check_branch
    %14 = sbr.rel (0) target = $region5
  $region4: #{tpu_custom_call.1} parent=0 // pred_region
    _
  $region5: #{tpu_custom_call.1} parent=0 // pred_fallthru
    _
  // Predicated region
  $region6: #{tpu_custom_call.1} parent=0 // pred_check
    _
  $region7: #{tpu_custom_call.1} parent=0 // pred_check_branch
    %16 = sbr.rel (0) target = $region9
  $region8: #{tpu_custom_call.1} parent=0 // pred_region
    _
  $region9: #{tpu_custom_call.1} parent=0 // pred_fallthru
    _
  // Predicated region
  $region10: #{tpu_custom_call.1} parent=0 // pred_check
    _
  $region11: #{tpu_custom_call.1} parent=0 // pred_check_branch
    %18 = sbr.rel (0) target = $region13
  $region12: #{tpu_custom_call.1} parent=0 // pred_region
    _
  $region13: #{tpu_custom_call.1} parent=0 // pred_fallthru
    _
  // Predicated region
  $region14: #{tpu_custom_call.1} parent=0 // pred_check
    _
  $region15: #{tpu_custom_call.1} parent=0 // pred_check_branch
    %20 = sbr.rel (0) target = $region17
  $region16: #{tpu_custom_call.1} parent=0 // pred_region
    _
  $region17: #{tpu_custom_call.1} parent=0 // pred_fallthru
    _
  // Predicated region
  $region18: #{tpu_custom_call.1} parent=0 // pred_check
    _
  $region19: #{tpu_custom_call.1} parent=0 // pred_check_branch
    %22 = sbr.rel (0) target = $region21
  $region20: #{tpu_custom_call.1} parent=0 // pred_region
    _
  $region21: #{tpu_custom_call.1} parent=0 // pred_fallthru
    _
  // Predicated region
  $region22: #{tpu_custom_call.1} parent=0 // pred_check
    _
  $region23: #{tpu_custom_call.1} parent=0 // pred_check_branch
    %24 = sbr.rel (0) target = $region25
  $region24: #{tpu_custom_call.1} parent=0 // pred_region
    _
  $region25: #{tpu_custom_call.1} parent=0 // pred_fallthru
    _
  %v25 = vld [vmem:[%s0] sm:$0xff]
  %v26 = vld [vmem:[%s0 + $0x8] sm:$0xff]
  %v27 = vld [vmem:[%s0 + $0x10] sm:$0xff]
  %v28 = vld [vmem:[%s0 + $0x18] sm:$0xff]
  %v29 = vld [vmem:[%s0 + $0x20] sm:$0xff]
  %v30 = vld [vmem:[%s0 + $0x28] sm:$0xff]
  %v31 = vld [vmem:[%s0 + $0x30] sm:$0xff]
  %v32 = vld [vmem:[%s0 + $0x38] sm:$0xff]
  %v33 = vld [vmem:[%s0 + $0x40] sm:$0xff]
  %v34 = vld [vmem:[%s0 + $0x48] sm:$0xff]
  %v35 = vld [vmem:[%s0 + $0x50] sm:$0xff]
  %v36 = vld [vmem:[%s0 + $0x58] sm:$0xff]
  %v37 = vld [vmem:[%s0 + $0x60] sm:$0xff]
  %v38 = vld [vmem:[%s0 + $0x68] sm:$0xff]
  %v39 = vld [vmem:[%s0 + $0x70] sm:$0xff]
  %v40 = vld [vmem:[%s0 + $0x78] sm:$0xff]
  %v41 = vld [vmem:[%s0 + $0x80] sm:$0xff]
  %v42 = vld [vmem:[%s0 + $0x88] sm:$0xff]
  %v43 = vld [vmem:[%s0 + $0x90] sm:$0xff]
  %v44 = vld [vmem:[%s0 + $0x98] sm:$0xff]
  %v45 = vld [vmem:[%s0 + $0xa0] sm:$0xff]
  %v46 = vld [vmem:[%s0 + $0xa8] sm:$0xff]
  %v47 = vld [vmem:[%s0 + $0xb0] sm:$0xff]
  %v48 = vld [vmem:[%s0 + $0xb8] sm:$0xff]
  %v49 = vld [vmem:[%s0 + $0xc0] sm:$0xff]
  %v50 = vld [vmem:[%s0 + $0xc8] sm:$0xff]
  %v51 = vld [vmem:[%s0 + $0xd0] sm:$0xff]
  %v52 = vld [vmem:[%s0 + $0xd8] sm:$0xff]
  %v53 = vld [vmem:[%s0 + $0xe0] sm:$0xff]
  %v54 = vld [vmem:[%s0 + $0xe8] sm:$0xff]
  %v55 = vld [vmem:[%s0 + $0xf0] sm:$0xff]
  %v56 = vld [vmem:[%s0 + $0xf8] sm:$0xff]
  %v57 = vld [vmem:[%s1] sm:$0xff]
  %v58 = vld [vmem:[%s1 + $0x8] sm:$0xff]
  %v59 = vld [vmem:[%s1 + $0x10] sm:$0xff]
  %v60 = vld [vmem:[%s1 + $0x18] sm:$0xff]
  %v61 = vld [vmem:[%s2] sm:$0x1]
  %v63 = vlaneseq
  %v64 = vshrl.u32 %v63, 7
  %v65 = vsub.s32 0, %v64
  %v66 = vrot.slane %v61, %v65
  %vm68 = vcmask 261120
  %v70 = vsel %vm68, %v25, 0
  %v73 = vsel %vm68, %v26, 0
  %v76 = vsel %vm68, %v27, 0
  %v79 = vsel %vm68, %v28, 0
  %v82 = vsel %vm68, %v29, 0
  %v85 = vsel %vm68, %v30, 0
  %v88 = vsel %vm68, %v31, 0
  %v91 = vsel %vm68, %v32, 0
  %v94 = vsel %vm68, %v33, 0
  %v97 = vsel %vm68, %v34, 0
  %v100 = vsel %vm68, %v35, 0
  %v103 = vsel %vm68, %v36, 0
  %v106 = vsel %vm68, %v37, 0
  %v109 = vsel %vm68, %v38, 0
  %v112 = vsel %vm68, %v39, 0
  %v115 = vsel %vm68, %v40, 0
  %v118 = vsel %vm68, %v41, 0
  %v121 = vsel %vm68, %v42, 0
  %v124 = vsel %vm68, %v43, 0
  %v127 = vsel %vm68, %v44, 0
  %v130 = vsel %vm68, %v45, 0
  %v133 = vsel %vm68, %v46, 0
  %v136 = vsel %vm68, %v47, 0
  %v139 = vsel %vm68, %v48, 0
  %v142 = vsel %vm68, %v49, 0
  %v145 = vsel %vm68, %v50, 0
  %v148 = vsel %vm68, %v51, 0
  %v151 = vsel %vm68, %v52, 0
  %v154 = vsel %vm68, %v53, 0
  %v157 = vsel %vm68, %v54, 0
  %v160 = vsel %vm68, %v55, 0
  %v163 = vsel %vm68, %v56, 0
  %165 = vmatprep.subr.mxu0 0.0
  %166 = vmatpush1.msra.mxu0 %v57
  %167 = vmatprep.subr.mxu0 0.0
  %168 = vmatpush1.msra.mxu0 %v58
  %169 = vmatprep.subr.mxu0 0.0
  %170 = vmatpush1.msra.mxu0 %v59
  %171 = vmatprep.subr.mxu0 0.0
  %172 = vmatpush1.msra.mxu0 %v60
  %173 = vmatprep.subr.mxu0 0.0
  %174 = vmatpush1.msra.mxu0 0.0
  %175 = vmatprep.subr.mxu0 0.0
  %176 = vmatpush1.msra.mxu0 0.0
  %177 = vmatprep.subr.mxu0 0.0
  %178 = vmatpush1.msra.mxu0 0.0
  %179 = vmatprep.subr.mxu0 0.0
  %180 = vmatpush1.msra.mxu0 0.0
  %181 = vmatprep.subr.mxu0 0.0
  %182 = vmatpush1.msra.mxu0 0.0
  %183 = vmatprep.subr.mxu0 0.0
  %184 = vmatpush1.msra.mxu0 0.0
  %185 = vmatprep.subr.mxu0 0.0
  %186 = vmatpush1.msra.mxu0 0.0
  %187 = vmatprep.subr.mxu0 0.0
  %188 = vmatpush1.msra.mxu0 0.0
  %189 = vmatprep.subr.mxu0 0.0
  %190 = vmatpush1.msra.mxu0 0.0
  %191 = vmatprep.subr.mxu0 0.0
  %192 = vmatpush1.msra.mxu0 0.0
  %193 = vmatprep.subr.mxu0 0.0
  %194 = vmatpush1.msra.mxu0 0.0
  %195 = vmatprep.subr.mxu0 0.0
  %196 = vmatpush1.msra.mxu0 0.0
  %197 = vmatprep.subr.mxu0 0.0
  %198 = vmatpush1.msra.mxu0 0.0
  %199 = vmatprep.subr.mxu0 0.0
  %200 = vmatpush1.msra.mxu0 0.0
  %201 = vmatprep.subr.mxu0 0.0
  %202 = vmatpush1.msra.mxu0 0.0
  %203 = vmatprep.subr.mxu0 0.0
  %204 = vmatpush1.msra.mxu0 0.0
  %205 = vmatprep.subr.mxu0 0.0
  %206 = vmatpush1.msra.mxu0 0.0
  %207 = vmatprep.subr.mxu0 0.0
  %208 = vmatpush1.msra.mxu0 0.0
  %209 = vmatprep.subr.mxu0 0.0
  %210 = vmatpush1.msra.mxu0 0.0
  %211 = vmatprep.subr.mxu0 0.0
  %212 = vmatpush1.msra.mxu0 0.0
  %213 = vmatprep.subr.mxu0 0.0
  %214 = vmatpush1.msra.mxu0 0.0
  %215 = vmatprep.subr.mxu0 0.0
  %216 = vmatpush1.msra.mxu0 0.0
  %217 = vmatprep.subr.mxu0 0.0
  %218 = vmatpush1.msra.mxu0 0.0
  %219 = vmatprep.subr.mxu0 0.0
  %220 = vmatpush1.msra.mxu0 0.0
  %221 = vmatprep.subr.mxu0 0.0
  %222 = vmatpush1.msra.mxu0 0.0
  %223 = vmatprep.subr.mxu0 0.0
  %224 = vmatpush1.msra.mxu0 0.0
  %225 = vmatprep.subr.mxu0 0.0
  %226 = vmatpush1.msra.mxu0 0.0
  %227 = vmatprep.subr.mxu0 0.0
  %228 = vmatpush1.msra.mxu0 0.0
  %229 = vmatprep.mubr.f32.mxu0 0.0
  %230 = vmatmul.mubr.f32.gmra.mrb[0].mxu0 %v70
  %v231 = vpop.f32.mrb[0].mxu0
  %v232 = vadd.f32 %v66, %v231
  %v233 = vpop.f32.mrb[0].mxu0
  %234 = vmatprep.mubr.f32.mxu0 0.0
  %235 = vmatmul.mubr.f32.gmra.mrb[0].mxu0 %v73
  %v236 = vpop.f32.mrb[0].mxu0
  %v237 = vadd.f32 %v66, %v236
  %v238 = vpop.f32.mrb[0].mxu0
  %239 = vmatprep.mubr.f32.mxu0 0.0
  %240 = vmatmul.mubr.f32.gmra.mrb[0].mxu0 %v76
  %v241 = vpop.f32.mrb[0].mxu0
  %v242 = vadd.f32 %v66, %v241
  %v243 = vpop.f32.mrb[0].mxu0
  %244 = vmatprep.mubr.f32.mxu0 0.0
  %245 = vmatmul.mubr.f32.gmra.mrb[0].mxu0 %v79
  %v246 = vpop.f32.mrb[0].mxu0
  %v247 = vadd.f32 %v66, %v246
  %v248 = vpop.f32.mrb[0].mxu0
  %249 = vmatprep.mubr.f32.mxu0 0.0
  %250 = vmatmul.mubr.f32.gmra.mrb[0].mxu0 %v82
  %v251 = vpop.f32.mrb[0].mxu0
  %v252 = vadd.f32 %v66, %v251
  %v253 = vpop.f32.mrb[0].mxu0
  %254 = vmatprep.mubr.f32.mxu0 0.0
  %255 = vmatmul.mubr.f32.gmra.mrb[0].mxu0 %v85
  %v256 = vpop.f32.mrb[0].mxu0
  %v257 = vadd.f32 %v66, %v256
  %v258 = vpop.f32.mrb[0].mxu0
  %259 = vmatprep.mubr.f32.mxu0 0.0
  %260 = vmatmul.mubr.f32.gmra.mrb[0].mxu0 %v88
  %v261 = vpop.f32.mrb[0].mxu0
  %v262 = vadd.f32 %v66, %v261
  %v263 = vpop.f32.mrb[0].mxu0
  %264 = vmatprep.mubr.f32.mxu0 0.0
  %265 = vmatmul.mubr.f32.gmra.mrb[0].mxu0 %v91
  %v266 = vpop.f32.mrb[0].mxu0
  %v267 = vadd.f32 %v66, %v266
  %v268 = vpop.f32.mrb[0].mxu0
  %269 = vmatprep.mubr.f32.mxu0 0.0
  %270 = vmatmul.mubr.f32.gmra.mrb[0].mxu0 %v94
  %v271 = vpop.f32.mrb[0].mxu0
  %v272 = vadd.f32 %v66, %v271
  %v273 = vpop.f32.mrb[0].mxu0
  %274 = vmatprep.mubr.f32.mxu0 0.0
  %275 = vmatmul.mubr.f32.gmra.mrb[0].mxu0 %v97
  %v276 = vpop.f32.mrb[0].mxu0
  %v277 = vadd.f32 %v66, %v276
  %v278 = vpop.f32.mrb[0].mxu0
  %279 = vmatprep.mubr.f32.mxu0 0.0
  %280 = vmatmul.mubr.f32.gmra.mrb[0].mxu0 %v100
  %v281 = vpop.f32.mrb[0].mxu0
  %v282 = vadd.f32 %v66, %v281
  %v283 = vpop.f32.mrb[0].mxu0
  %284 = vmatprep.mubr.f32.mxu0 0.0
  %285 = vmatmul.mubr.f32.gmra.mrb[0].mxu0 %v103
  %v286 = vpop.f32.mrb[0].mxu0
  %v287 = vadd.f32 %v66, %v286
  %v288 = vpop.f32.mrb[0].mxu0
  %289 = vmatprep.mubr.f32.mxu0 0.0
  %290 = vmatmul.mubr.f32.gmra.mrb[0].mxu0 %v106
  %v291 = vpop.f32.mrb[0].mxu0
  %v292 = vadd.f32 %v66, %v291
  %v293 = vpop.f32.mrb[0].mxu0
  %294 = vmatprep.mubr.f32.mxu0 0.0
  %295 = vmatmul.mubr.f32.gmra.mrb[0].mxu0 %v109
  %v296 = vpop.f32.mrb[0].mxu0
  %v297 = vadd.f32 %v66, %v296
  %v298 = vpop.f32.mrb[0].mxu0
  %299 = vmatprep.mubr.f32.mxu0 0.0
  %300 = vmatmul.mubr.f32.gmra.mrb[0].mxu0 %v112
  %v301 = vpop.f32.mrb[0].mxu0
  %v302 = vadd.f32 %v66, %v301
  %v303 = vpop.f32.mrb[0].mxu0
  %304 = vmatprep.mubr.f32.mxu0 0.0
  %305 = vmatmul.mubr.f32.gmra.mrb[0].mxu0 %v115
  %v306 = vpop.f32.mrb[0].mxu0
  %v307 = vadd.f32 %v66, %v306
  %v308 = vpop.f32.mrb[0].mxu0
  %309 = vmatprep.mubr.f32.mxu0 0.0
  %310 = vmatmul.mubr.f32.gmra.mrb[0].mxu0 %v118
  %v311 = vpop.f32.mrb[0].mxu0
  %v312 = vadd.f32 %v66, %v311
  %v313 = vpop.f32.mrb[0].mxu0
  %314 = vmatprep.mubr.f32.mxu0 0.0
  %315 = vmatmul.mubr.f32.gmra.mrb[0].mxu0 %v121
  %v316 = vpop.f32.mrb[0].mxu0
  %v317 = vadd.f32 %v66, %v316
  %v318 = vpop.f32.mrb[0].mxu0
  %319 = vmatprep.mubr.f32.mxu0 0.0
  %320 = vmatmul.mubr.f32.gmra.mrb[0].mxu0 %v124
  %v321 = vpop.f32.mrb[0].mxu0
  %v322 = vadd.f32 %v66, %v321
  %v323 = vpop.f32.mrb[0].mxu0
  %324 = vmatprep.mubr.f32.mxu0 0.0
  %325 = vmatmul.mubr.f32.gmra.mrb[0].mxu0 %v127
  %v326 = vpop.f32.mrb[0].mxu0
  %v327 = vadd.f32 %v66, %v326
  %v328 = vpop.f32.mrb[0].mxu0
  %329 = vmatprep.mubr.f32.mxu0 0.0
  %330 = vmatmul.mubr.f32.gmra.mrb[0].mxu0 %v130
  %v331 = vpop.f32.mrb[0].mxu0
  %v332 = vadd.f32 %v66, %v331
  %v333 = vpop.f32.mrb[0].mxu0
  %334 = vmatprep.mubr.f32.mxu0 0.0
  %335 = vmatmul.mubr.f32.gmra.mrb[0].mxu0 %v133
  %v336 = vpop.f32.mrb[0].mxu0
  %v337 = vadd.f32 %v66, %v336
  %v338 = vpop.f32.mrb[0].mxu0
  %339 = vmatprep.mubr.f32.mxu0 0.0
  %340 = vmatmul.mubr.f32.gmra.mrb[0].mxu0 %v136
  %v341 = vpop.f32.mrb[0].mxu0
  %v342 = vadd.f32 %v66, %v341
  %v343 = vpop.f32.mrb[0].mxu0
  %344 = vmatprep.mubr.f32.mxu0 0.0
  %345 = vmatmul.mubr.f32.gmra.mrb[0].mxu0 %v139
  %v346 = vpop.f32.mrb[0].mxu0
  %v347 = vadd.f32 %v66, %v346
  %v348 = vpop.f32.mrb[0].mxu0
  %349 = vmatprep.mubr.f32.mxu0 0.0
  %350 = vmatmul.mubr.f32.gmra.mrb[0].mxu0 %v142
  %v351 = vpop.f32.mrb[0].mxu0
  %v352 = vadd.f32 %v66, %v351
  %v353 = vpop.f32.mrb[0].mxu0
  %354 = vmatprep.mubr.f32.mxu0 0.0
  %355 = vmatmul.mubr.f32.gmra.mrb[0].mxu0 %v145
  %v356 = vpop.f32.mrb[0].mxu0
  %v357 = vadd.f32 %v66, %v356
  %v358 = vpop.f32.mrb[0].mxu0
  %359 = vmatprep.mubr.f32.mxu0 0.0
  %360 = vmatmul.mubr.f32.gmra.mrb[0].mxu0 %v148
  %v361 = vpop.f32.mrb[0].mxu0
  %v362 = vadd.f32 %v66, %v361
  %v363 = vpop.f32.mrb[0].mxu0
  %364 = vmatprep.mubr.f32.mxu0 0.0
  %365 = vmatmul.mubr.f32.gmra.mrb[0].mxu0 %v151
  %v366 = vpop.f32.mrb[0].mxu0
  %v367 = vadd.f32 %v66, %v366
  %v368 = vpop.f32.mrb[0].mxu0
  %369 = vmatprep.mubr.f32.mxu0 0.0
  %370 = vmatmul.mubr.f32.gmra.mrb[0].mxu0 %v154
  %v371 = vpop.f32.mrb[0].mxu0
  %v372 = vadd.f32 %v66, %v371
  %v373 = vpop.f32.mrb[0].mxu0
  %374 = vmatprep.mubr.f32.mxu0 0.0
  %375 = vmatmul.mubr.f32.gmra.mrb[0].mxu0 %v157
  %v376 = vpop.f32.mrb[0].mxu0
  %v377 = vadd.f32 %v66, %v376
  %v378 = vpop.f32.mrb[0].mxu0
  %379 = vmatprep.mubr.f32.mxu0 0.0
  %380 = vmatmul.mubr.f32.gmra.mrb[0].mxu0 %v160
  %v381 = vpop.f32.mrb[0].mxu0
  %v382 = vadd.f32 %v66, %v381
  %v383 = vpop.f32.mrb[0].mxu0
  %384 = vmatprep.mubr.f32.mxu0 0.0
  %385 = vmatmul.mubr.f32.gmra.mrb[0].mxu0 %v163
  %v386 = vpop.f32.mrb[0].mxu0
  %v387 = vadd.f32 %v66, %v386
  %v388 = vpop.f32.mrb[0].mxu0
  %389 = vdwg.mxu0
  %v390 = vtanh.pop %v232
  %v391 = vtanh.pop %v237
  %v392 = vtanh.pop %v242
  %v393 = vtanh.pop %v247
  %v394 = vtanh.pop %v252
  %v395 = vtanh.pop %v257
  %v396 = vtanh.pop %v262
  %v397 = vtanh.pop %v267
  %v398 = vtanh.pop %v272
  %v399 = vtanh.pop %v277
  %v400 = vtanh.pop %v282
  %v401 = vtanh.pop %v287
  %v402 = vtanh.pop %v292
  %v403 = vtanh.pop %v297
  %v404 = vtanh.pop %v302
  %v405 = vtanh.pop %v307
  %v406 = vtanh.pop %v312
  %v407 = vtanh.pop %v317
  %v408 = vtanh.pop %v322
  %v409 = vtanh.pop %v327
  %v410 = vtanh.pop %v332
  %v411 = vtanh.pop %v337
  %v412 = vtanh.pop %v342
  %v413 = vtanh.pop %v347
  %v414 = vtanh.pop %v352
  %v415 = vtanh.pop %v357
  %v416 = vtanh.pop %v362
  %v417 = vtanh.pop %v367
  %v418 = vtanh.pop %v372
  %v419 = vtanh.pop %v377
  %v420 = vtanh.pop %v382
  %v421 = vtanh.pop %v387
  %v422 = vld [vmem:[%s3] sm:$0xff]
  %v423 = vld [vmem:[%s3 + $0x8] sm:$0xff]
  %v424 = vld [vmem:[%s3 + $0x10] sm:$0xff]
  %v425 = vld [vmem:[%s3 + $0x18] sm:$0xff]
  %v426 = vld [vmem:[%s4] sm:$0x1]
  %v428 = vlaneseq
  %v429 = vshrl.u32 %v428, 7
  %v430 = vsub.s32 0, %v429
  %v431 = vrot.slane %v426, %v430
  %v434 = vsel %vm68, %v390, 0
  %v437 = vsel %vm68, %v391, 0
  %v440 = vsel %vm68, %v392, 0
  %v443 = vsel %vm68, %v393, 0
  %v446 = vsel %vm68, %v394, 0
  %v449 = vsel %vm68, %v395, 0
  %v452 = vsel %vm68, %v396, 0
  %v455 = vsel %vm68, %v397, 0
  %v458 = vsel %vm68, %v398, 0
  %v461 = vsel %vm68, %v399, 0
  %v464 = vsel %vm68, %v400, 0
  %v467 = vsel %vm68, %v401, 0
  %v470 = vsel %vm68, %v402, 0
  %v473 = vsel %vm68, %v403, 0
  %v476 = vsel %vm68, %v404, 0
  %v479 = vsel %vm68, %v405, 0
  %v482 = vsel %vm68, %v406, 0
  %v485 = vsel %vm68, %v407, 0
  %v488 = vsel %vm68, %v408, 0
  %v491 = vsel %vm68, %v409, 0
  %v494 = vsel %vm68, %v410, 0
  %v497 = vsel %vm68, %v411, 0
  %v500 = vsel %vm68, %v412, 0
  %v503 = vsel %vm68, %v413, 0
  %v506 = vsel %vm68, %v414, 0
  %v509 = vsel %vm68, %v415, 0
  %v512 = vsel %vm68, %v416, 0
  %v515 = vsel %vm68, %v417, 0
  %v518 = vsel %vm68, %v418, 0
  %v521 = vsel %vm68, %v419, 0
  %v524 = vsel %vm68, %v420, 0
  %v527 = vsel %vm68, %v421, 0
  %529 = vmatprep.subr.mxu0 0.0
  %530 = vmatpush1.msra.mxu0 %v422
  %531 = vmatprep.subr.mxu0 0.0
  %532 = vmatpush1.msra.mxu0 %v423
  %533 = vmatprep.subr.mxu0 0.0
  %534 = vmatpush1.msra.mxu0 %v424
  %535 = vmatprep.subr.mxu0 0.0
  %536 = vmatpush1.msra.mxu0 %v425
  %537 = vmatprep.subr.mxu0 0.0
  %538 = vmatpush1.msra.mxu0 0.0
  %539 = vmatprep.subr.mxu0 0.0
  %540 = vmatpush1.msra.mxu0 0.0
  %541 = vmatprep.subr.mxu0 0.0
  %542 = vmatpush1.msra.mxu0 0.0
  %543 = vmatprep.subr.mxu0 0.0
  %544 = vmatpush1.msra.mxu0 0.0
  %545 = vmatprep.subr.mxu0 0.0
  %546 = vmatpush1.msra.mxu0 0.0
  %547 = vmatprep.subr.mxu0 0.0
  %548 = vmatpush1.msra.mxu0 0.0
  %549 = vmatprep.subr.mxu0 0.0
  %550 = vmatpush1.msra.mxu0 0.0
  %551 = vmatprep.subr.mxu0 0.0
  %552 = vmatpush1.msra.mxu0 0.0
  %553 = vmatprep.subr.mxu0 0.0
  %554 = vmatpush1.msra.mxu0 0.0
  %555 = vmatprep.subr.mxu0 0.0
  %556 = vmatpush1.msra.mxu0 0.0
  %557 = vmatprep.subr.mxu0 0.0
  %558 = vmatpush1.msra.mxu0 0.0
  %559 = vmatprep.subr.mxu0 0.0
  %560 = vmatpush1.msra.mxu0 0.0
  %561 = vmatprep.subr.mxu0 0.0
  %562 = vmatpush1.msra.mxu0 0.0
  %563 = vmatprep.subr.mxu0 0.0
  %564 = vmatpush1.msra.mxu0 0.0
  %565 = vmatprep.subr.mxu0 0.0
  %566 = vmatpush1.msra.mxu0 0.0
  %567 = vmatprep.subr.mxu0 0.0
  %568 = vmatpush1.msra.mxu0 0.0
  %569 = vmatprep.subr.mxu0 0.0
  %570 = vmatpush1.msra.mxu0 0.0
  %571 = vmatprep.subr.mxu0 0.0
  %572 = vmatpush1.msra.mxu0 0.0
  %573 = vmatprep.subr.mxu0 0.0
  %574 = vmatpush1.msra.mxu0 0.0
  %575 = vmatprep.subr.mxu0 0.0
  %576 = vmatpush1.msra.mxu0 0.0
  %577 = vmatprep.subr.mxu0 0.0
  %578 = vmatpush1.msra.mxu0 0.0
  %579 = vmatprep.subr.mxu0 0.0
  %580 = vmatpush1.msra.mxu0 0.0
  %581 = vmatprep.subr.mxu0 0.0
  %582 = vmatpush1.msra.mxu0 0.0
  %583 = vmatprep.subr.mxu0 0.0
  %584 = vmatpush1.msra.mxu0 0.0
  %585 = vmatprep.subr.mxu0 0.0
  %586 = vmatpush1.msra.mxu0 0.0
  %587 = vmatprep.subr.mxu0 0.0
  %588 = vmatpush1.msra.mxu0 0.0
  %589 = vmatprep.subr.mxu0 0.0
  %590 = vmatpush1.msra.mxu0 0.0
  %591 = vmatprep.subr.mxu0 0.0
  %592 = vmatpush1.msra.mxu0 0.0
  %593 = vmatprep.mubr.f32.mxu0 0.0
  %594 = vmatmul.mubr.f32.gmra.mrb[0].mxu0 %v434
  %v595 = vpop.f32.mrb[0].mxu0
  %v596 = vadd.f32 %v431, %v595
  %v597 = vpop.f32.mrb[0].mxu0
  %598 = vmatprep.mubr.f32.mxu0 0.0
  %599 = vmatmul.mubr.f32.gmra.mrb[0].mxu0 %v437
  %v600 = vpop.f32.mrb[0].mxu0
  %v601 = vadd.f32 %v431, %v600
  %v602 = vpop.f32.mrb[0].mxu0
  %603 = vmatprep.mubr.f32.mxu0 0.0
  %604 = vmatmul.mubr.f32.gmra.mrb[0].mxu0 %v440
  %v605 = vpop.f32.mrb[0].mxu0
  %v606 = vadd.f32 %v431, %v605
  %v607 = vpop.f32.mrb[0].mxu0
  %608 = vmatprep.mubr.f32.mxu0 0.0
  %609 = vmatmul.mubr.f32.gmra.mrb[0].mxu0 %v443
  %v610 = vpop.f32.mrb[0].mxu0
  %v611 = vadd.f32 %v431, %v610
  %v612 = vpop.f32.mrb[0].mxu0
  %613 = vmatprep.mubr.f32.mxu0 0.0
  %614 = vmatmul.mubr.f32.gmra.mrb[0].mxu0 %v446
  %v615 = vpop.f32.mrb[0].mxu0
  %v616 = vadd.f32 %v431, %v615
  %v617 = vpop.f32.mrb[0].mxu0
  %618 = vmatprep.mubr.f32.mxu0 0.0
  %619 = vmatmul.mubr.f32.gmra.mrb[0].mxu0 %v449
  %v620 = vpop.f32.mrb[0].mxu0
  %v621 = vadd.f32 %v431, %v620
  %v622 = vpop.f32.mrb[0].mxu0
  %623 = vmatprep.mubr.f32.mxu0 0.0
  %624 = vmatmul.mubr.f32.gmra.mrb[0].mxu0 %v452
  %v625 = vpop.f32.mrb[0].mxu0
  %v626 = vadd.f32 %v431, %v625
  %v627 = vpop.f32.mrb[0].mxu0
  %628 = vmatprep.mubr.f32.mxu0 0.0
  %629 = vmatmul.mubr.f32.gmra.mrb[0].mxu0 %v455
  %v630 = vpop.f32.mrb[0].mxu0
  %v631 = vadd.f32 %v431, %v630
  %v632 = vpop.f32.mrb[0].mxu0
  %633 = vmatprep.mubr.f32.mxu0 0.0
  %634 = vmatmul.mubr.f32.gmra.mrb[0].mxu0 %v458
  %v635 = vpop.f32.mrb[0].mxu0
  %v636 = vadd.f32 %v431, %v635
  %v637 = vpop.f32.mrb[0].mxu0
  %638 = vmatprep.mubr.f32.mxu0 0.0
  %639 = vmatmul.mubr.f32.gmra.mrb[0].mxu0 %v461
  %v640 = vpop.f32.mrb[0].mxu0
  %v641 = vadd.f32 %v431, %v640
  %v642 = vpop.f32.mrb[0].mxu0
  %643 = vmatprep.mubr.f32.mxu0 0.0
  %644 = vmatmul.mubr.f32.gmra.mrb[0].mxu0 %v464
  %v645 = vpop.f32.mrb[0].mxu0
  %v646 = vadd.f32 %v431, %v645
  %v647 = vpop.f32.mrb[0].mxu0
  %648 = vmatprep.mubr.f32.mxu0 0.0
  %649 = vmatmul.mubr.f32.gmra.mrb[0].mxu0 %v467
  %v650 = vpop.f32.mrb[0].mxu0
  %v651 = vadd.f32 %v431, %v650
  %v652 = vpop.f32.mrb[0].mxu0
  %653 = vmatprep.mubr.f32.mxu0 0.0
  %654 = vmatmul.mubr.f32.gmra.mrb[0].mxu0 %v470
  %v655 = vpop.f32.mrb[0].mxu0
  %v656 = vadd.f32 %v431, %v655
  %v657 = vpop.f32.mrb[0].mxu0
  %658 = vmatprep.mubr.f32.mxu0 0.0
  %659 = vmatmul.mubr.f32.gmra.mrb[0].mxu0 %v473
  %v660 = vpop.f32.mrb[0].mxu0
  %v661 = vadd.f32 %v431, %v660
  %v662 = vpop.f32.mrb[0].mxu0
  %663 = vmatprep.mubr.f32.mxu0 0.0
  %664 = vmatmul.mubr.f32.gmra.mrb[0].mxu0 %v476
  %v665 = vpop.f32.mrb[0].mxu0
  %v666 = vadd.f32 %v431, %v665
  %v667 = vpop.f32.mrb[0].mxu0
  %668 = vmatprep.mubr.f32.mxu0 0.0
  %669 = vmatmul.mubr.f32.gmra.mrb[0].mxu0 %v479
  %v670 = vpop.f32.mrb[0].mxu0
  %v671 = vadd.f32 %v431, %v670
  %v672 = vpop.f32.mrb[0].mxu0
  %673 = vmatprep.mubr.f32.mxu0 0.0
  %674 = vmatmul.mubr.f32.gmra.mrb[0].mxu0 %v482
  %v675 = vpop.f32.mrb[0].mxu0
  %v676 = vadd.f32 %v431, %v675
  %v677 = vpop.f32.mrb[0].mxu0
  %678 = vmatprep.mubr.f32.mxu0 0.0
  %679 = vmatmul.mubr.f32.gmra.mrb[0].mxu0 %v485
  %v680 = vpop.f32.mrb[0].mxu0
  %v681 = vadd.f32 %v431, %v680
  %v682 = vpop.f32.mrb[0].mxu0
  %683 = vmatprep.mubr.f32.mxu0 0.0
  %684 = vmatmul.mubr.f32.gmra.mrb[0].mxu0 %v488
  %v685 = vpop.f32.mrb[0].mxu0
  %v686 = vadd.f32 %v431, %v685
  %v687 = vpop.f32.mrb[0].mxu0
  %688 = vmatprep.mubr.f32.mxu0 0.0
  %689 = vmatmul.mubr.f32.gmra.mrb[0].mxu0 %v491
  %v690 = vpop.f32.mrb[0].mxu0
  %v691 = vadd.f32 %v431, %v690
  %v692 = vpop.f32.mrb[0].mxu0
  %693 = vmatprep.mubr.f32.mxu0 0.0
  %694 = vmatmul.mubr.f32.gmra.mrb[0].mxu0 %v494
  %v695 = vpop.f32.mrb[0].mxu0
  %v696 = vadd.f32 %v431, %v695
  %v697 = vpop.f32.mrb[0].mxu0
  %698 = vmatprep.mubr.f32.mxu0 0.0
  %699 = vmatmul.mubr.f32.gmra.mrb[0].mxu0 %v497
  %v700 = vpop.f32.mrb[0].mxu0
  %v701 = vadd.f32 %v431, %v700
  %v702 = vpop.f32.mrb[0].mxu0
  %703 = vmatprep.mubr.f32.mxu0 0.0
  %704 = vmatmul.mubr.f32.gmra.mrb[0].mxu0 %v500
  %v705 = vpop.f32.mrb[0].mxu0
  %v706 = vadd.f32 %v431, %v705
  %v707 = vpop.f32.mrb[0].mxu0
  %708 = vmatprep.mubr.f32.mxu0 0.0
  %709 = vmatmul.mubr.f32.gmra.mrb[0].mxu0 %v503
  %v710 = vpop.f32.mrb[0].mxu0
  %v711 = vadd.f32 %v431, %v710
  %v712 = vpop.f32.mrb[0].mxu0
  %713 = vmatprep.mubr.f32.mxu0 0.0
  %714 = vmatmul.mubr.f32.gmra.mrb[0].mxu0 %v506
  %v715 = vpop.f32.mrb[0].mxu0
  %v716 = vadd.f32 %v431, %v715
  %v717 = vpop.f32.mrb[0].mxu0
  %718 = vmatprep.mubr.f32.mxu0 0.0
  %719 = vmatmul.mubr.f32.gmra.mrb[0].mxu0 %v509
  %v720 = vpop.f32.mrb[0].mxu0
  %v721 = vadd.f32 %v431, %v720
  %v722 = vpop.f32.mrb[0].mxu0
  %723 = vmatprep.mubr.f32.mxu0 0.0
  %724 = vmatmul.mubr.f32.gmra.mrb[0].mxu0 %v512
  %v725 = vpop.f32.mrb[0].mxu0
  %v726 = vadd.f32 %v431, %v725
  %v727 = vpop.f32.mrb[0].mxu0
  %728 = vmatprep.mubr.f32.mxu0 0.0
  %729 = vmatmul.mubr.f32.gmra.mrb[0].mxu0 %v515
  %v730 = vpop.f32.mrb[0].mxu0
  %v731 = vadd.f32 %v431, %v730
  %v732 = vpop.f32.mrb[0].mxu0
  %733 = vmatprep.mubr.f32.mxu0 0.0
  %734 = vmatmul.mubr.f32.gmra.mrb[0].mxu0 %v518
  %v735 = vpop.f32.mrb[0].mxu0
  %v736 = vadd.f32 %v431, %v735
  %v737 = vpop.f32.mrb[0].mxu0
  %738 = vmatprep.mubr.f32.mxu0 0.0
  %739 = vmatmul.mubr.f32.gmra.mrb[0].mxu0 %v521
  %v740 = vpop.f32.mrb[0].mxu0
  %v741 = vadd.f32 %v431, %v740
  %v742 = vpop.f32.mrb[0].mxu0
  %743 = vmatprep.mubr.f32.mxu0 0.0
  %744 = vmatmul.mubr.f32.gmra.mrb[0].mxu0 %v524
  %v745 = vpop.f32.mrb[0].mxu0
  %v746 = vadd.f32 %v431, %v745
  %v747 = vpop.f32.mrb[0].mxu0
  %748 = vmatprep.mubr.f32.mxu0 0.0
  %749 = vmatmul.mubr.f32.gmra.mrb[0].mxu0 %v527
  %v750 = vpop.f32.mrb[0].mxu0
  %v751 = vadd.f32 %v431, %v750
  %v752 = vpop.f32.mrb[0].mxu0
  %753 = vdwg.mxu0
  %v754 = vtanh.pop %v596
  %v755 = vtanh.pop %v601
  %v756 = vtanh.pop %v606
  %v757 = vtanh.pop %v611
  %v758 = vtanh.pop %v616
  %v759 = vtanh.pop %v621
  %v760 = vtanh.pop %v626
  %v761 = vtanh.pop %v631
  %v762 = vtanh.pop %v636
  %v763 = vtanh.pop %v641
  %v764 = vtanh.pop %v646
  %v765 = vtanh.pop %v651
  %v766 = vtanh.pop %v656
  %v767 = vtanh.pop %v661
  %v768 = vtanh.pop %v666
  %v769 = vtanh.pop %v671
  %v770 = vtanh.pop %v676
  %v771 = vtanh.pop %v681
  %v772 = vtanh.pop %v686
  %v773 = vtanh.pop %v691
  %v774 = vtanh.pop %v696
  %v775 = vtanh.pop %v701
  %v776 = vtanh.pop %v706
  %v777 = vtanh.pop %v711
  %v778 = vtanh.pop %v716
  %v779 = vtanh.pop %v721
  %v780 = vtanh.pop %v726
  %v781 = vtanh.pop %v731
  %v782 = vtanh.pop %v736
  %v783 = vtanh.pop %v741
  %v784 = vtanh.pop %v746
  %v785 = vtanh.pop %v751
  %v786 = vld [vmem:[%s5] sm:$0xff]
  %v787 = vld [vmem:[%s5 + $0x8] sm:$0xff]
  %vm788 = vcmask 130048
  %v790 = vsel %vm788, %v754, 0
  %v793 = vsel %vm788, %v755, 0
  %v796 = vsel %vm788, %v756, 0
  %v799 = vsel %vm788, %v757, 0
  %v802 = vsel %vm788, %v758, 0
  %v805 = vsel %vm788, %v759, 0
  %v808 = vsel %vm788, %v760, 0
  %v811 = vsel %vm788, %v761, 0
  %v814 = vsel %vm788, %v762, 0
  %v817 = vsel %vm788, %v763, 0
  %v820 = vsel %vm788, %v764, 0
  %v823 = vsel %vm788, %v765, 0
  %v826 = vsel %vm788, %v766, 0
  %v829 = vsel %vm788, %v767, 0
  %v832 = vsel %vm788, %v768, 0
  %v835 = vsel %vm788, %v769, 0
  %v838 = vsel %vm788, %v770, 0
  %v841 = vsel %vm788, %v771, 0
  %v844 = vsel %vm788, %v772, 0
  %v847 = vsel %vm788, %v773, 0
  %v850 = vsel %vm788, %v774, 0
  %v853 = vsel %vm788, %v775, 0
  %v856 = vsel %vm788, %v776, 0
  %v859 = vsel %vm788, %v777, 0
  %v862 = vsel %vm788, %v778, 0
  %v865 = vsel %vm788, %v779, 0
  %v868 = vsel %vm788, %v780, 0
  %v871 = vsel %vm788, %v781, 0
  %v874 = vsel %vm788, %v782, 0
  %v877 = vsel %vm788, %v783, 0
  %v880 = vsel %vm788, %v784, 0
  %v883 = vsel %vm788, %v785, 0
  %885 = vmatprep.subr.mxu0 0.0
  %886 = vmatpush1.msra.mxu0 %v786
  %887 = vmatprep.subr.mxu0 0.0
  %888 = vmatpush1.msra.mxu0 %v787
  %889 = vmatprep.subr.mxu0 0.0
  %890 = vmatpush1.msra.mxu0 0.0
  %891 = vmatprep.subr.mxu0 0.0
  %892 = vmatpush1.msra.mxu0 0.0
  %893 = vmatprep.subr.mxu0 0.0
  %894 = vmatpush1.msra.mxu0 0.0
  %895 = vmatprep.subr.mxu0 0.0
  %896 = vmatpush1.msra.mxu0 0.0
  %897 = vmatprep.subr.mxu0 0.0
  %898 = vmatpush1.msra.mxu0 0.0
  %899 = vmatprep.subr.mxu0 0.0
  %900 = vmatpush1.msra.mxu0 0.0
  %901 = vmatprep.subr.mxu0 0.0
  %902 = vmatpush1.msra.mxu0 0.0
  %903 = vmatprep.subr.mxu0 0.0
  %904 = vmatpush1.msra.mxu0 0.0
  %905 = vmatprep.subr.mxu0 0.0
  %906 = vmatpush1.msra.mxu0 0.0
  %907 = vmatprep.subr.mxu0 0.0
  %908 = vmatpush1.msra.mxu0 0.0
  %909 = vmatprep.subr.mxu0 0.0
  %910 = vmatpush1.msra.mxu0 0.0
  %911 = vmatprep.subr.mxu0 0.0
  %912 = vmatpush1.msra.mxu0 0.0
  %913 = vmatprep.subr.mxu0 0.0
  %914 = vmatpush1.msra.mxu0 0.0
  %915 = vmatprep.subr.mxu0 0.0
  %916 = vmatpush1.msra.mxu0 0.0
  %917 = vmatprep.subr.mxu0 0.0
  %918 = vmatpush1.msra.mxu0 0.0
  %919 = vmatprep.subr.mxu0 0.0
  %920 = vmatpush1.msra.mxu0 0.0
  %921 = vmatprep.subr.mxu0 0.0
  %922 = vmatpush1.msra.mxu0 0.0
  %923 = vmatprep.subr.mxu0 0.0
  %924 = vmatpush1.msra.mxu0 0.0
  %925 = vmatprep.subr.mxu0 0.0
  %926 = vmatpush1.msra.mxu0 0.0
  %927 = vmatprep.subr.mxu0 0.0
  %928 = vmatpush1.msra.mxu0 0.0
  %929 = vmatprep.subr.mxu0 0.0
  %930 = vmatpush1.msra.mxu0 0.0
  %931 = vmatprep.subr.mxu0 0.0
  %932 = vmatpush1.msra.mxu0 0.0
  %933 = vmatprep.subr.mxu0 0.0
  %934 = vmatpush1.msra.mxu0 0.0
  %935 = vmatprep.subr.mxu0 0.0
  %936 = vmatpush1.msra.mxu0 0.0
  %937 = vmatprep.subr.mxu0 0.0
  %938 = vmatpush1.msra.mxu0 0.0
  %939 = vmatprep.subr.mxu0 0.0
  %940 = vmatpush1.msra.mxu0 0.0
  %941 = vmatprep.subr.mxu0 0.0
  %942 = vmatpush1.msra.mxu0 0.0
  %943 = vmatprep.subr.mxu0 0.0
  %944 = vmatpush1.msra.mxu0 0.0
  %945 = vmatprep.subr.mxu0 0.0
  %946 = vmatpush1.msra.mxu0 0.0
  %947 = vmatprep.subr.mxu0 0.0
  %948 = vmatpush1.msra.mxu0 0.0
  %949 = vmatprep.mubr.f32.mxu0 0.0
  %950 = vmatmul.mubr.f32.gmra.mrb[0].mxu0 %v790
  %v951 = vpop.f32.mrb[0].mxu0
  %v952 = vadd.f32 0.0, %v951
  %v953 = vpop.f32.mrb[0].mxu0
  %954 = vmatprep.mubr.f32.mxu0 0.0
  %955 = vmatmul.mubr.f32.gmra.mrb[0].mxu0 %v793
  %v956 = vpop.f32.mrb[0].mxu0
  %v957 = vadd.f32 0.0, %v956
  %v958 = vpop.f32.mrb[0].mxu0
  %959 = vmatprep.mubr.f32.mxu0 0.0
  %960 = vmatmul.mubr.f32.gmra.mrb[0].mxu0 %v796
  %v961 = vpop.f32.mrb[0].mxu0
  %v962 = vadd.f32 0.0, %v961
  %v963 = vpop.f32.mrb[0].mxu0
  %964 = vmatprep.mubr.f32.mxu0 0.0
  %965 = vmatmul.mubr.f32.gmra.mrb[0].mxu0 %v799
  %v966 = vpop.f32.mrb[0].mxu0
  %v967 = vadd.f32 0.0, %v966
  %v968 = vpop.f32.mrb[0].mxu0
  %969 = vmatprep.mubr.f32.mxu0 0.0
  %970 = vmatmul.mubr.f32.gmra.mrb[0].mxu0 %v802
  %v971 = vpop.f32.mrb[0].mxu0
  %v972 = vadd.f32 0.0, %v971
  %v973 = vpop.f32.mrb[0].mxu0
  %974 = vmatprep.mubr.f32.mxu0 0.0
  %975 = vmatmul.mubr.f32.gmra.mrb[0].mxu0 %v805
  %v976 = vpop.f32.mrb[0].mxu0
  %v977 = vadd.f32 0.0, %v976
  %v978 = vpop.f32.mrb[0].mxu0
  %979 = vmatprep.mubr.f32.mxu0 0.0
  %980 = vmatmul.mubr.f32.gmra.mrb[0].mxu0 %v808
  %v981 = vpop.f32.mrb[0].mxu0
  %v982 = vadd.f32 0.0, %v981
  %v983 = vpop.f32.mrb[0].mxu0
  %984 = vmatprep.mubr.f32.mxu0 0.0
  %985 = vmatmul.mubr.f32.gmra.mrb[0].mxu0 %v811
  %v986 = vpop.f32.mrb[0].mxu0
  %v987 = vadd.f32 0.0, %v986
  %v988 = vpop.f32.mrb[0].mxu0
  %989 = vmatprep.mubr.f32.mxu0 0.0
  %990 = vmatmul.mubr.f32.gmra.mrb[0].mxu0 %v814
  %v991 = vpop.f32.mrb[0].mxu0
  %v992 = vadd.f32 0.0, %v991
  %v993 = vpop.f32.mrb[0].mxu0
  %994 = vmatprep.mubr.f32.mxu0 0.0
  %995 = vmatmul.mubr.f32.gmra.mrb[0].mxu0 %v817
  %v996 = vpop.f32.mrb[0].mxu0
  %v997 = vadd.f32 0.0, %v996
  %v998 = vpop.f32.mrb[0].mxu0
  %999 = vmatprep.mubr.f32.mxu0 0.0
  %1000 = vmatmul.mubr.f32.gmra.mrb[0].mxu0 %v820
  %v1001 = vpop.f32.mrb[0].mxu0
  %v1002 = vadd.f32 0.0, %v1001
  %v1003 = vpop.f32.mrb[0].mxu0
  %1004 = vmatprep.mubr.f32.mxu0 0.0
  %1005 = vmatmul.mubr.f32.gmra.mrb[0].mxu0 %v823
  %v1006 = vpop.f32.mrb[0].mxu0
  %v1007 = vadd.f32 0.0, %v1006
  %v1008 = vpop.f32.mrb[0].mxu0
  %1009 = vmatprep.mubr.f32.mxu0 0.0
  %1010 = vmatmul.mubr.f32.gmra.mrb[0].mxu0 %v826
  %v1011 = vpop.f32.mrb[0].mxu0
  %v1012 = vadd.f32 0.0, %v1011
  %v1013 = vpop.f32.mrb[0].mxu0
  %1014 = vmatprep.mubr.f32.mxu0 0.0
  %1015 = vmatmul.mubr.f32.gmra.mrb[0].mxu0 %v829
  %v1016 = vpop.f32.mrb[0].mxu0
  %v1017 = vadd.f32 0.0, %v1016
  %v1018 = vpop.f32.mrb[0].mxu0
  %1019 = vmatprep.mubr.f32.mxu0 0.0
  %1020 = vmatmul.mubr.f32.gmra.mrb[0].mxu0 %v832
  %v1021 = vpop.f32.mrb[0].mxu0
  %v1022 = vadd.f32 0.0, %v1021
  %v1023 = vpop.f32.mrb[0].mxu0
  %1024 = vmatprep.mubr.f32.mxu0 0.0
  %1025 = vmatmul.mubr.f32.gmra.mrb[0].mxu0 %v835
  %v1026 = vpop.f32.mrb[0].mxu0
  %v1027 = vadd.f32 0.0, %v1026
  %v1028 = vpop.f32.mrb[0].mxu0
  %1029 = vmatprep.mubr.f32.mxu0 0.0
  %1030 = vmatmul.mubr.f32.gmra.mrb[0].mxu0 %v838
  %v1031 = vpop.f32.mrb[0].mxu0
  %v1032 = vadd.f32 0.0, %v1031
  %v1033 = vpop.f32.mrb[0].mxu0
  %1034 = vmatprep.mubr.f32.mxu0 0.0
  %1035 = vmatmul.mubr.f32.gmra.mrb[0].mxu0 %v841
  %v1036 = vpop.f32.mrb[0].mxu0
  %v1037 = vadd.f32 0.0, %v1036
  %v1038 = vpop.f32.mrb[0].mxu0
  %1039 = vmatprep.mubr.f32.mxu0 0.0
  %1040 = vmatmul.mubr.f32.gmra.mrb[0].mxu0 %v844
  %v1041 = vpop.f32.mrb[0].mxu0
  %v1042 = vadd.f32 0.0, %v1041
  %v1043 = vpop.f32.mrb[0].mxu0
  %1044 = vmatprep.mubr.f32.mxu0 0.0
  %1045 = vmatmul.mubr.f32.gmra.mrb[0].mxu0 %v847
  %v1046 = vpop.f32.mrb[0].mxu0
  %v1047 = vadd.f32 0.0, %v1046
  %v1048 = vpop.f32.mrb[0].mxu0
  %1049 = vmatprep.mubr.f32.mxu0 0.0
  %1050 = vmatmul.mubr.f32.gmra.mrb[0].mxu0 %v850
  %v1051 = vpop.f32.mrb[0].mxu0
  %v1052 = vadd.f32 0.0, %v1051
  %v1053 = vpop.f32.mrb[0].mxu0
  %1054 = vmatprep.mubr.f32.mxu0 0.0
  %1055 = vmatmul.mubr.f32.gmra.mrb[0].mxu0 %v853
  %v1056 = vpop.f32.mrb[0].mxu0
  %v1057 = vadd.f32 0.0, %v1056
  %v1058 = vpop.f32.mrb[0].mxu0
  %1059 = vmatprep.mubr.f32.mxu0 0.0
  %1060 = vmatmul.mubr.f32.gmra.mrb[0].mxu0 %v856
  %v1061 = vpop.f32.mrb[0].mxu0
  %v1062 = vadd.f32 0.0, %v1061
  %v1063 = vpop.f32.mrb[0].mxu0
  %1064 = vmatprep.mubr.f32.mxu0 0.0
  %1065 = vmatmul.mubr.f32.gmra.mrb[0].mxu0 %v859
  %v1066 = vpop.f32.mrb[0].mxu0
  %v1067 = vadd.f32 0.0, %v1066
  %v1068 = vpop.f32.mrb[0].mxu0
  %1069 = vmatprep.mubr.f32.mxu0 0.0
  %1070 = vmatmul.mubr.f32.gmra.mrb[0].mxu0 %v862
  %v1071 = vpop.f32.mrb[0].mxu0
  %v1072 = vadd.f32 0.0, %v1071
  %v1073 = vpop.f32.mrb[0].mxu0
  %1074 = vmatprep.mubr.f32.mxu0 0.0
  %1075 = vmatmul.mubr.f32.gmra.mrb[0].mxu0 %v865
  %v1076 = vpop.f32.mrb[0].mxu0
  %v1077 = vadd.f32 0.0, %v1076
  %v1078 = vpop.f32.mrb[0].mxu0
  %1079 = vmatprep.mubr.f32.mxu0 0.0
  %1080 = vmatmul.mubr.f32.gmra.mrb[0].mxu0 %v868
  %v1081 = vpop.f32.mrb[0].mxu0
  %v1082 = vadd.f32 0.0, %v1081
  %v1083 = vpop.f32.mrb[0].mxu0
  %1084 = vmatprep.mubr.f32.mxu0 0.0
  %1085 = vmatmul.mubr.f32.gmra.mrb[0].mxu0 %v871
  %v1086 = vpop.f32.mrb[0].mxu0
  %v1087 = vadd.f32 0.0, %v1086
  %v1088 = vpop.f32.mrb[0].mxu0
  %1089 = vmatprep.mubr.f32.mxu0 0.0
  %1090 = vmatmul.mubr.f32.gmra.mrb[0].mxu0 %v874
  %v1091 = vpop.f32.mrb[0].mxu0
  %v1092 = vadd.f32 0.0, %v1091
  %v1093 = vpop.f32.mrb[0].mxu0
  %1094 = vmatprep.mubr.f32.mxu0 0.0
  %1095 = vmatmul.mubr.f32.gmra.mrb[0].mxu0 %v877
  %v1096 = vpop.f32.mrb[0].mxu0
  %v1097 = vadd.f32 0.0, %v1096
  %v1098 = vpop.f32.mrb[0].mxu0
  %1099 = vmatprep.mubr.f32.mxu0 0.0
  %1100 = vmatmul.mubr.f32.gmra.mrb[0].mxu0 %v880
  %v1101 = vpop.f32.mrb[0].mxu0
  %v1102 = vadd.f32 0.0, %v1101
  %v1103 = vpop.f32.mrb[0].mxu0
  %1104 = vmatprep.mubr.f32.mxu0 0.0
  %1105 = vmatmul.mubr.f32.gmra.mrb[0].mxu0 %v883
  %v1106 = vpop.f32.mrb[0].mxu0
  %v1107 = vadd.f32 0.0, %v1106
  %v1108 = vpop.f32.mrb[0].mxu0
  %1109 = vdwg.mxu0
  %s1110 = scalar_lea.vmem %s1, 32
  %v1111 = vld [vmem:[%s1110] sm:$0xff]
  %v1112 = vld [vmem:[%s1110 + $0x8] sm:$0xff]
  %v1113 = vld [vmem:[%s1110 + $0x10] sm:$0xff]
  %v1114 = vld [vmem:[%s1110 + $0x18] sm:$0xff]
  %s1115 = scalar_lea.vmem %s2, 1
  %v1116 = vld [vmem:[%s1115] sm:$0x1]
  %v1118 = vlaneseq
  %v1119 = vshrl.u32 %v1118, 7
  %v1120 = vsub.s32 0, %v1119
  %v1121 = vrot.slane %v1116, %v1120
  %1123 = vmatprep.subr.mxu0 0.0
  %1124 = vmatpush1.msra.mxu0 %v1111
  %1125 = vmatprep.subr.mxu0 0.0
  %1126 = vmatpush1.msra.mxu0 %v1112
  %1127 = vmatprep.subr.mxu0 0.0
  %1128 = vmatpush1.msra.mxu0 %v1113
  %1129 = vmatprep.subr.mxu0 0.0
  %1130 = vmatpush1.msra.mxu0 %v1114
  %1131 = vmatprep.subr.mxu0 0.0
  %1132 = vmatpush1.msra.mxu0 0.0
  %1133 = vmatprep.subr.mxu0 0.0
  %1134 = vmatpush1.msra.mxu0 0.0
  %1135 = vmatprep.subr.mxu0 0.0
  %1136 = vmatpush1.msra.mxu0 0.0
  %1137 = vmatprep.subr.mxu0 0.0
  %1138 = vmatpush1.msra.mxu0 0.0
  %1139 = vmatprep.subr.mxu0 0.0
  %1140 = vmatpush1.msra.mxu0 0.0
  %1141 = vmatprep.subr.mxu0 0.0
  %1142 = vmatpush1.msra.mxu0 0.0
  %1143 = vmatprep.subr.mxu0 0.0
  %1144 = vmatpush1.msra.mxu0 0.0
  %1145 = vmatprep.subr.mxu0 0.0
  %1146 = vmatpush1.msra.mxu0 0.0
  %1147 = vmatprep.subr.mxu0 0.0
  %1148 = vmatpush1.msra.mxu0 0.0
  %1149 = vmatprep.subr.mxu0 0.0
  %1150 = vmatpush1.msra.mxu0 0.0
  %1151 = vmatprep.subr.mxu0 0.0
  %1152 = vmatpush1.msra.mxu0 0.0
  %1153 = vmatprep.subr.mxu0 0.0
  %1154 = vmatpush1.msra.mxu0 0.0
  %1155 = vmatprep.subr.mxu0 0.0
  %1156 = vmatpush1.msra.mxu0 0.0
  %1157 = vmatprep.subr.mxu0 0.0
  %1158 = vmatpush1.msra.mxu0 0.0
  %1159 = vmatprep.subr.mxu0 0.0
  %1160 = vmatpush1.msra.mxu0 0.0
  %1161 = vmatprep.subr.mxu0 0.0
  %1162 = vmatpush1.msra.mxu0 0.0
  %1163 = vmatprep.subr.mxu0 0.0
  %1164 = vmatpush1.msra.mxu0 0.0
  %1165 = vmatprep.subr.mxu0 0.0
  %1166 = vmatpush1.msra.mxu0 0.0
  %1167 = vmatprep.subr.mxu0 0.0
  %1168 = vmatpush1.msra.mxu0 0.0
  %1169 = vmatprep.subr.mxu0 0.0
  %1170 = vmatpush1.msra.mxu0 0.0
  %1171 = vmatprep.subr.mxu0 0.0
  %1172 = vmatpush1.msra.mxu0 0.0
  %1173 = vmatprep.subr.mxu0 0.0
  %1174 = vmatpush1.msra.mxu0 0.0
  %1175 = vmatprep.subr.mxu0 0.0
  %1176 = vmatpush1.msra.mxu0 0.0
  %1177 = vmatprep.subr.mxu0 0.0
  %1178 = vmatpush1.msra.mxu0 0.0
  %1179 = vmatprep.subr.mxu0 0.0
  %1180 = vmatpush1.msra.mxu0 0.0
  %1181 = vmatprep.subr.mxu0 0.0
  %1182 = vmatpush1.msra.mxu0 0.0
  %1183 = vmatprep.subr.mxu0 0.0
  %1184 = vmatpush1.msra.mxu0 0.0
  %1185 = vmatprep.subr.mxu0 0.0
  %1186 = vmatpush1.msra.mxu0 0.0
  %1187 = vmatprep.mubr.f32.mxu0 0.0
  %1188 = vmatmul.mubr.f32.gmra.mrb[0].mxu0 %v70
  %v1189 = vpop.f32.mrb[0].mxu0
  %v1190 = vadd.f32 %v1121, %v1189
  %v1191 = vpop.f32.mrb[0].mxu0
  %1192 = vmatprep.mubr.f32.mxu0 0.0
  %1193 = vmatmul.mubr.f32.gmra.mrb[0].mxu0 %v73
  %v1194 = vpop.f32.mrb[0].mxu0
  %v1195 = vadd.f32 %v1121, %v1194
  %v1196 = vpop.f32.mrb[0].mxu0
  %1197 = vmatprep.mubr.f32.mxu0 0.0
  %1198 = vmatmul.mubr.f32.gmra.mrb[0].mxu0 %v76
  %v1199 = vpop.f32.mrb[0].mxu0
  %v1200 = vadd.f32 %v1121, %v1199
  %v1201 = vpop.f32.mrb[0].mxu0
  %1202 = vmatprep.mubr.f32.mxu0 0.0
  %1203 = vmatmul.mubr.f32.gmra.mrb[0].mxu0 %v79
  %v1204 = vpop.f32.mrb[0].mxu0
  %v1205 = vadd.f32 %v1121, %v1204
  %v1206 = vpop.f32.mrb[0].mxu0
  %1207 = vmatprep.mubr.f32.mxu0 0.0
  %1208 = vmatmul.mubr.f32.gmra.mrb[0].mxu0 %v82
  %v1209 = vpop.f32.mrb[0].mxu0
  %v1210 = vadd.f32 %v1121, %v1209
  %v1211 = vpop.f32.mrb[0].mxu0
  %1212 = vmatprep.mubr.f32.mxu0 0.0
  %1213 = vmatmul.mubr.f32.gmra.mrb[0].mxu0 %v85
  %v1214 = vpop.f32.mrb[0].mxu0
  %v1215 = vadd.f32 %v1121, %v1214
  %v1216 = vpop.f32.mrb[0].mxu0
  %1217 = vmatprep.mubr.f32.mxu0 0.0
  %1218 = vmatmul.mubr.f32.gmra.mrb[0].mxu0 %v88
  %v1219 = vpop.f32.mrb[0].mxu0
  %v1220 = vadd.f32 %v1121, %v1219
  %v1221 = vpop.f32.mrb[0].mxu0
  %1222 = vmatprep.mubr.f32.mxu0 0.0
  %1223 = vmatmul.mubr.f32.gmra.mrb[0].mxu0 %v91
  %v1224 = vpop.f32.mrb[0].mxu0
  %v1225 = vadd.f32 %v1121, %v1224
  %v1226 = vpop.f32.mrb[0].mxu0
  %1227 = vmatprep.mubr.f32.mxu0 0.0
  %1228 = vmatmul.mubr.f32.gmra.mrb[0].mxu0 %v94
  %v1229 = vpop.f32.mrb[0].mxu0
  %v1230 = vadd.f32 %v1121, %v1229
  %v1231 = vpop.f32.mrb[0].mxu0
  %1232 = vmatprep.mubr.f32.mxu0 0.0
  %1233 = vmatmul.mubr.f32.gmra.mrb[0].mxu0 %v97
  %v1234 = vpop.f32.mrb[0].mxu0
  %v1235 = vadd.f32 %v1121, %v1234
  %v1236 = vpop.f32.mrb[0].mxu0
  %1237 = vmatprep.mubr.f32.mxu0 0.0
  %1238 = vmatmul.mubr.f32.gmra.mrb[0].mxu0 %v100
  %v1239 = vpop.f32.mrb[0].mxu0
  %v1240 = vadd.f32 %v1121, %v1239
  %v1241 = vpop.f32.mrb[0].mxu0
  %1242 = vmatprep.mubr.f32.mxu0 0.0
  %1243 = vmatmul.mubr.f32.gmra.mrb[0].mxu0 %v103
  %v1244 = vpop.f32.mrb[0].mxu0
  %v1245 = vadd.f32 %v1121, %v1244
  %v1246 = vpop.f32.mrb[0].mxu0
  %1247 = vmatprep.mubr.f32.mxu0 0.0
  %1248 = vmatmul.mubr.f32.gmra.mrb[0].mxu0 %v106
  %v1249 = vpop.f32.mrb[0].mxu0
  %v1250 = vadd.f32 %v1121, %v1249
  %v1251 = vpop.f32.mrb[0].mxu0
  %1252 = vmatprep.mubr.f32.mxu0 0.0
  %1253 = vmatmul.mubr.f32.gmra.mrb[0].mxu0 %v109
  %v1254 = vpop.f32.mrb[0].mxu0
  %v1255 = vadd.f32 %v1121, %v1254
  %v1256 = vpop.f32.mrb[0].mxu0
  %1257 = vmatprep.mubr.f32.mxu0 0.0
  %1258 = vmatmul.mubr.f32.gmra.mrb[0].mxu0 %v112
  %v1259 = vpop.f32.mrb[0].mxu0
  %v1260 = vadd.f32 %v1121, %v1259
  %v1261 = vpop.f32.mrb[0].mxu0
  %1262 = vmatprep.mubr.f32.mxu0 0.0
  %1263 = vmatmul.mubr.f32.gmra.mrb[0].mxu0 %v115
  %v1264 = vpop.f32.mrb[0].mxu0
  %v1265 = vadd.f32 %v1121, %v1264
  %v1266 = vpop.f32.mrb[0].mxu0
  %1267 = vmatprep.mubr.f32.mxu0 0.0
  %1268 = vmatmul.mubr.f32.gmra.mrb[0].mxu0 %v118
  %v1269 = vpop.f32.mrb[0].mxu0
  %v1270 = vadd.f32 %v1121, %v1269
  %v1271 = vpop.f32.mrb[0].mxu0
  %1272 = vmatprep.mubr.f32.mxu0 0.0
  %1273 = vmatmul.mubr.f32.gmra.mrb[0].mxu0 %v121
  %v1274 = vpop.f32.mrb[0].mxu0
  %v1275 = vadd.f32 %v1121, %v1274
  %v1276 = vpop.f32.mrb[0].mxu0
  %1277 = vmatprep.mubr.f32.mxu0 0.0
  %1278 = vmatmul.mubr.f32.gmra.mrb[0].mxu0 %v124
  %v1279 = vpop.f32.mrb[0].mxu0
  %v1280 = vadd.f32 %v1121, %v1279
  %v1281 = vpop.f32.mrb[0].mxu0
  %1282 = vmatprep.mubr.f32.mxu0 0.0
  %1283 = vmatmul.mubr.f32.gmra.mrb[0].mxu0 %v127
  %v1284 = vpop.f32.mrb[0].mxu0
  %v1285 = vadd.f32 %v1121, %v1284
  %v1286 = vpop.f32.mrb[0].mxu0
  %1287 = vmatprep.mubr.f32.mxu0 0.0
  %1288 = vmatmul.mubr.f32.gmra.mrb[0].mxu0 %v130
  %v1289 = vpop.f32.mrb[0].mxu0
  %v1290 = vadd.f32 %v1121, %v1289
  %v1291 = vpop.f32.mrb[0].mxu0
  %1292 = vmatprep.mubr.f32.mxu0 0.0
  %1293 = vmatmul.mubr.f32.gmra.mrb[0].mxu0 %v133
  %v1294 = vpop.f32.mrb[0].mxu0
  %v1295 = vadd.f32 %v1121, %v1294
  %v1296 = vpop.f32.mrb[0].mxu0
  %1297 = vmatprep.mubr.f32.mxu0 0.0
  %1298 = vmatmul.mubr.f32.gmra.mrb[0].mxu0 %v136
  %v1299 = vpop.f32.mrb[0].mxu0
  %v1300 = vadd.f32 %v1121, %v1299
  %v1301 = vpop.f32.mrb[0].mxu0
  %1302 = vmatprep.mubr.f32.mxu0 0.0
  %1303 = vmatmul.mubr.f32.gmra.mrb[0].mxu0 %v139
  %v1304 = vpop.f32.mrb[0].mxu0
  %v1305 = vadd.f32 %v1121, %v1304
  %v1306 = vpop.f32.mrb[0].mxu0
  %1307 = vmatprep.mubr.f32.mxu0 0.0
  %1308 = vmatmul.mubr.f32.gmra.mrb[0].mxu0 %v142
  %v1309 = vpop.f32.mrb[0].mxu0
  %v1310 = vadd.f32 %v1121, %v1309
  %v1311 = vpop.f32.mrb[0].mxu0
  %1312 = vmatprep.mubr.f32.mxu0 0.0
  %1313 = vmatmul.mubr.f32.gmra.mrb[0].mxu0 %v145
  %v1314 = vpop.f32.mrb[0].mxu0
  %v1315 = vadd.f32 %v1121, %v1314
  %v1316 = vpop.f32.mrb[0].mxu0
  %1317 = vmatprep.mubr.f32.mxu0 0.0
  %1318 = vmatmul.mubr.f32.gmra.mrb[0].mxu0 %v148
  %v1319 = vpop.f32.mrb[0].mxu0
  %v1320 = vadd.f32 %v1121, %v1319
  %v1321 = vpop.f32.mrb[0].mxu0
  %1322 = vmatprep.mubr.f32.mxu0 0.0
  %1323 = vmatmul.mubr.f32.gmra.mrb[0].mxu0 %v151
  %v1324 = vpop.f32.mrb[0].mxu0
  %v1325 = vadd.f32 %v1121, %v1324
  %v1326 = vpop.f32.mrb[0].mxu0
  %1327 = vmatprep.mubr.f32.mxu0 0.0
  %1328 = vmatmul.mubr.f32.gmra.mrb[0].mxu0 %v154
  %v1329 = vpop.f32.mrb[0].mxu0
  %v1330 = vadd.f32 %v1121, %v1329
  %v1331 = vpop.f32.mrb[0].mxu0
  %1332 = vmatprep.mubr.f32.mxu0 0.0
  %1333 = vmatmul.mubr.f32.gmra.mrb[0].mxu0 %v157
  %v1334 = vpop.f32.mrb[0].mxu0
  %v1335 = vadd.f32 %v1121, %v1334
  %v1336 = vpop.f32.mrb[0].mxu0
  %1337 = vmatprep.mubr.f32.mxu0 0.0
  %1338 = vmatmul.mubr.f32.gmra.mrb[0].mxu0 %v160
  %v1339 = vpop.f32.mrb[0].mxu0
  %v1340 = vadd.f32 %v1121, %v1339
  %v1341 = vpop.f32.mrb[0].mxu0
  %1342 = vmatprep.mubr.f32.mxu0 0.0
  %1343 = vmatmul.mubr.f32.gmra.mrb[0].mxu0 %v163
  %v1344 = vpop.f32.mrb[0].mxu0
  %v1345 = vadd.f32 %v1121, %v1344
  %v1346 = vpop.f32.mrb[0].mxu0
  %1347 = vdwg.mxu0
  %v1348 = vtanh.pop %v1190
  %v1349 = vtanh.pop %v1195
  %v1350 = vtanh.pop %v1200
  %v1351 = vtanh.pop %v1205
  %v1352 = vtanh.pop %v1210
  %v1353 = vtanh.pop %v1215
  %v1354 = vtanh.pop %v1220
  %v1355 = vtanh.pop %v1225
  %v1356 = vtanh.pop %v1230
  %v1357 = vtanh.pop %v1235
  %v1358 = vtanh.pop %v1240
  %v1359 = vtanh.pop %v1245
  %v1360 = vtanh.pop %v1250
  %v1361 = vtanh.pop %v1255
  %v1362 = vtanh.pop %v1260
  %v1363 = vtanh.pop %v1265
  %v1364 = vtanh.pop %v1270
  %v1365 = vtanh.pop %v1275
  %v1366 = vtanh.pop %v1280
  %v1367 = vtanh.pop %v1285
  %v1368 = vtanh.pop %v1290
  %v1369 = vtanh.pop %v1295
  %v1370 = vtanh.pop %v1300
  %v1371 = vtanh.pop %v1305
  %v1372 = vtanh.pop %v1310
  %v1373 = vtanh.pop %v1315
  %v1374 = vtanh.pop %v1320
  %v1375 = vtanh.pop %v1325
  %v1376 = vtanh.pop %v1330
  %v1377 = vtanh.pop %v1335
  %v1378 = vtanh.pop %v1340
  %v1379 = vtanh.pop %v1345
  %s1380 = scalar_lea.vmem %s3, 32
  %v1381 = vld [vmem:[%s1380] sm:$0xff]
  %v1382 = vld [vmem:[%s1380 + $0x8] sm:$0xff]
  %v1383 = vld [vmem:[%s1380 + $0x10] sm:$0xff]
  %v1384 = vld [vmem:[%s1380 + $0x18] sm:$0xff]
  %s1385 = scalar_lea.vmem %s4, 1
  %v1386 = vld [vmem:[%s1385] sm:$0x1]
  %v1388 = vlaneseq
  %v1389 = vshrl.u32 %v1388, 7
  %v1390 = vsub.s32 0, %v1389
  %v1391 = vrot.slane %v1386, %v1390
  %v1394 = vsel %vm68, %v1348, 0
  %v1397 = vsel %vm68, %v1349, 0
  %v1400 = vsel %vm68, %v1350, 0
  %v1403 = vsel %vm68, %v1351, 0
  %v1406 = vsel %vm68, %v1352, 0
  %v1409 = vsel %vm68, %v1353, 0
  %v1412 = vsel %vm68, %v1354, 0
  %v1415 = vsel %vm68, %v1355, 0
  %v1418 = vsel %vm68, %v1356, 0
  %v1421 = vsel %vm68, %v1357, 0
  %v1424 = vsel %vm68, %v1358, 0
  %v1427 = vsel %vm68, %v1359, 0
  %v1430 = vsel %vm68, %v1360, 0
  %v1433 = vsel %vm68, %v1361, 0
  %v1436 = vsel %vm68, %v1362, 0
  %v1439 = vsel %vm68, %v1363, 0
  %v1442 = vsel %vm68, %v1364, 0
  %v1445 = vsel %vm68, %v1365, 0
  %v1448 = vsel %vm68, %v1366, 0
  %v1451 = vsel %vm68, %v1367, 0
  %v1454 = vsel %vm68, %v1368, 0
  %v1457 = vsel %vm68, %v1369, 0
  %v1460 = vsel %vm68, %v1370, 0
  %v1463 = vsel %vm68, %v1371, 0
  %v1466 = vsel %vm68, %v1372, 0
  %v1469 = vsel %vm68, %v1373, 0
  %v1472 = vsel %vm68, %v1374, 0
  %v1475 = vsel %vm68, %v1375, 0
  %v1478 = vsel %vm68, %v1376, 0
  %v1481 = vsel %vm68, %v1377, 0
  %v1484 = vsel %vm68, %v1378, 0
  %v1487 = vsel %vm68, %v1379, 0
  %1489 = vmatprep.subr.mxu0 0.0
  %1490 = vmatpush1.msra.mxu0 %v1381
  %1491 = vmatprep.subr.mxu0 0.0
  %1492 = vmatpush1.msra.mxu0 %v1382
  %1493 = vmatprep.subr.mxu0 0.0
  %1494 = vmatpush1.msra.mxu0 %v1383
  %1495 = vmatprep.subr.mxu0 0.0
  %1496 = vmatpush1.msra.mxu0 %v1384
  %1497 = vmatprep.subr.mxu0 0.0
  %1498 = vmatpush1.msra.mxu0 0.0
  %1499 = vmatprep.subr.mxu0 0.0
  %1500 = vmatpush1.msra.mxu0 0.0
  %1501 = vmatprep.subr.mxu0 0.0
  %1502 = vmatpush1.msra.mxu0 0.0
  %1503 = vmatprep.subr.mxu0 0.0
  %1504 = vmatpush1.msra.mxu0 0.0
  %1505 = vmatprep.subr.mxu0 0.0
  %1506 = vmatpush1.msra.mxu0 0.0
  %1507 = vmatprep.subr.mxu0 0.0
  %1508 = vmatpush1.msra.mxu0 0.0
  %1509 = vmatprep.subr.mxu0 0.0
  %1510 = vmatpush1.msra.mxu0 0.0
  %1511 = vmatprep.subr.mxu0 0.0
  %1512 = vmatpush1.msra.mxu0 0.0
  %1513 = vmatprep.subr.mxu0 0.0
  %1514 = vmatpush1.msra.mxu0 0.0
  %1515 = vmatprep.subr.mxu0 0.0
  %1516 = vmatpush1.msra.mxu0 0.0
  %1517 = vmatprep.subr.mxu0 0.0
  %1518 = vmatpush1.msra.mxu0 0.0
  %1519 = vmatprep.subr.mxu0 0.0
  %1520 = vmatpush1.msra.mxu0 0.0
  %1521 = vmatprep.subr.mxu0 0.0
  %1522 = vmatpush1.msra.mxu0 0.0
  %1523 = vmatprep.subr.mxu0 0.0
  %1524 = vmatpush1.msra.mxu0 0.0
  %1525 = vmatprep.subr.mxu0 0.0
  %1526 = vmatpush1.msra.mxu0 0.0
  %1527 = vmatprep.subr.mxu0 0.0
  %1528 = vmatpush1.msra.mxu0 0.0
  %1529 = vmatprep.subr.mxu0 0.0
  %1530 = vmatpush1.msra.mxu0 0.0
  %1531 = vmatprep.subr.mxu0 0.0
  %1532 = vmatpush1.msra.mxu0 0.0
  %1533 = vmatprep.subr.mxu0 0.0
  %1534 = vmatpush1.msra.mxu0 0.0
  %1535 = vmatprep.subr.mxu0 0.0
  %1536 = vmatpush1.msra.mxu0 0.0
  %1537 = vmatprep.subr.mxu0 0.0
  %1538 = vmatpush1.msra.mxu0 0.0
  %1539 = vmatprep.subr.mxu0 0.0
  %1540 = vmatpush1.msra.mxu0 0.0
  %1541 = vmatprep.subr.mxu0 0.0
  %1542 = vmatpush1.msra.mxu0 0.0
  %1543 = vmatprep.subr.mxu0 0.0
  %1544 = vmatpush1.msra.mxu0 0.0
  %1545 = vmatprep.subr.mxu0 0.0
  %1546 = vmatpush1.msra.mxu0 0.0
  %1547 = vmatprep.subr.mxu0 0.0
  %1548 = vmatpush1.msra.mxu0 0.0
  %1549 = vmatprep.subr.mxu0 0.0
  %1550 = vmatpush1.msra.mxu0 0.0
  %1551 = vmatprep.subr.mxu0 0.0
  %1552 = vmatpush1.msra.mxu0 0.0
  %1553 = vmatprep.mubr.f32.mxu0 0.0
  %1554 = vmatmul.mubr.f32.gmra.mrb[0].mxu0 %v1394
  %v1555 = vpop.f32.mrb[0].mxu0
  %v1556 = vadd.f32 %v1391, %v1555
  %v1557 = vpop.f32.mrb[0].mxu0
  %1558 = vmatprep.mubr.f32.mxu0 0.0
  %1559 = vmatmul.mubr.f32.gmra.mrb[0].mxu0 %v1397
  %v1560 = vpop.f32.mrb[0].mxu0
  %v1561 = vadd.f32 %v1391, %v1560
  %v1562 = vpop.f32.mrb[0].mxu0
  %1563 = vmatprep.mubr.f32.mxu0 0.0
  %1564 = vmatmul.mubr.f32.gmra.mrb[0].mxu0 %v1400
  %v1565 = vpop.f32.mrb[0].mxu0
  %v1566 = vadd.f32 %v1391, %v1565
  %v1567 = vpop.f32.mrb[0].mxu0
  %1568 = vmatprep.mubr.f32.mxu0 0.0
  %1569 = vmatmul.mubr.f32.gmra.mrb[0].mxu0 %v1403
  %v1570 = vpop.f32.mrb[0].mxu0
  %v1571 = vadd.f32 %v1391, %v1570
  %v1572 = vpop.f32.mrb[0].mxu0
  %1573 = vmatprep.mubr.f32.mxu0 0.0
  %1574 = vmatmul.mubr.f32.gmra.mrb[0].mxu0 %v1406
  %v1575 = vpop.f32.mrb[0].mxu0
  %v1576 = vadd.f32 %v1391, %v1575
  %v1577 = vpop.f32.mrb[0].mxu0
  %1578 = vmatprep.mubr.f32.mxu0 0.0
  %1579 = vmatmul.mubr.f32.gmra.mrb[0].mxu0 %v1409
  %v1580 = vpop.f32.mrb[0].mxu0
  %v1581 = vadd.f32 %v1391, %v1580
  %v1582 = vpop.f32.mrb[0].mxu0
  %1583 = vmatprep.mubr.f32.mxu0 0.0
  %1584 = vmatmul.mubr.f32.gmra.mrb[0].mxu0 %v1412
  %v1585 = vpop.f32.mrb[0].mxu0
  %v1586 = vadd.f32 %v1391, %v1585
  %v1587 = vpop.f32.mrb[0].mxu0
  %1588 = vmatprep.mubr.f32.mxu0 0.0
  %1589 = vmatmul.mubr.f32.gmra.mrb[0].mxu0 %v1415
  %v1590 = vpop.f32.mrb[0].mxu0
  %v1591 = vadd.f32 %v1391, %v1590
  %v1592 = vpop.f32.mrb[0].mxu0
  %1593 = vmatprep.mubr.f32.mxu0 0.0
  %1594 = vmatmul.mubr.f32.gmra.mrb[0].mxu0 %v1418
  %v1595 = vpop.f32.mrb[0].mxu0
  %v1596 = vadd.f32 %v1391, %v1595
  %v1597 = vpop.f32.mrb[0].mxu0
  %1598 = vmatprep.mubr.f32.mxu0 0.0
  %1599 = vmatmul.mubr.f32.gmra.mrb[0].mxu0 %v1421
  %v1600 = vpop.f32.mrb[0].mxu0
  %v1601 = vadd.f32 %v1391, %v1600
  %v1602 = vpop.f32.mrb[0].mxu0
  %1603 = vmatprep.mubr.f32.mxu0 0.0
  %1604 = vmatmul.mubr.f32.gmra.mrb[0].mxu0 %v1424
  %v1605 = vpop.f32.mrb[0].mxu0
  %v1606 = vadd.f32 %v1391, %v1605
  %v1607 = vpop.f32.mrb[0].mxu0
  %1608 = vmatprep.mubr.f32.mxu0 0.0
  %1609 = vmatmul.mubr.f32.gmra.mrb[0].mxu0 %v1427
  %v1610 = vpop.f32.mrb[0].mxu0
  %v1611 = vadd.f32 %v1391, %v1610
  %v1612 = vpop.f32.mrb[0].mxu0
  %1613 = vmatprep.mubr.f32.mxu0 0.0
  %1614 = vmatmul.mubr.f32.gmra.mrb[0].mxu0 %v1430
  %v1615 = vpop.f32.mrb[0].mxu0
  %v1616 = vadd.f32 %v1391, %v1615
  %v1617 = vpop.f32.mrb[0].mxu0
  %1618 = vmatprep.mubr.f32.mxu0 0.0
  %1619 = vmatmul.mubr.f32.gmra.mrb[0].mxu0 %v1433
  %v1620 = vpop.f32.mrb[0].mxu0
  %v1621 = vadd.f32 %v1391, %v1620
  %v1622 = vpop.f32.mrb[0].mxu0
  %1623 = vmatprep.mubr.f32.mxu0 0.0
  %1624 = vmatmul.mubr.f32.gmra.mrb[0].mxu0 %v1436
  %v1625 = vpop.f32.mrb[0].mxu0
  %v1626 = vadd.f32 %v1391, %v1625
  %v1627 = vpop.f32.mrb[0].mxu0
  %1628 = vmatprep.mubr.f32.mxu0 0.0
  %1629 = vmatmul.mubr.f32.gmra.mrb[0].mxu0 %v1439
  %v1630 = vpop.f32.mrb[0].mxu0
  %v1631 = vadd.f32 %v1391, %v1630
  %v1632 = vpop.f32.mrb[0].mxu0
  %1633 = vmatprep.mubr.f32.mxu0 0.0
  %1634 = vmatmul.mubr.f32.gmra.mrb[0].mxu0 %v1442
  %v1635 = vpop.f32.mrb[0].mxu0
  %v1636 = vadd.f32 %v1391, %v1635
  %v1637 = vpop.f32.mrb[0].mxu0
  %1638 = vmatprep.mubr.f32.mxu0 0.0
  %1639 = vmatmul.mubr.f32.gmra.mrb[0].mxu0 %v1445
  %v1640 = vpop.f32.mrb[0].mxu0
  %v1641 = vadd.f32 %v1391, %v1640
  %v1642 = vpop.f32.mrb[0].mxu0
  %1643 = vmatprep.mubr.f32.mxu0 0.0
  %1644 = vmatmul.mubr.f32.gmra.mrb[0].mxu0 %v1448
  %v1645 = vpop.f32.mrb[0].mxu0
  %v1646 = vadd.f32 %v1391, %v1645
  %v1647 = vpop.f32.mrb[0].mxu0
  %1648 = vmatprep.mubr.f32.mxu0 0.0
  %1649 = vmatmul.mubr.f32.gmra.mrb[0].mxu0 %v1451
  %v1650 = vpop.f32.mrb[0].mxu0
  %v1651 = vadd.f32 %v1391, %v1650
  %v1652 = vpop.f32.mrb[0].mxu0
  %1653 = vmatprep.mubr.f32.mxu0 0.0
  %1654 = vmatmul.mubr.f32.gmra.mrb[0].mxu0 %v1454
  %v1655 = vpop.f32.mrb[0].mxu0
  %v1656 = vadd.f32 %v1391, %v1655
  %v1657 = vpop.f32.mrb[0].mxu0
  %1658 = vmatprep.mubr.f32.mxu0 0.0
  %1659 = vmatmul.mubr.f32.gmra.mrb[0].mxu0 %v1457
  %v1660 = vpop.f32.mrb[0].mxu0
  %v1661 = vadd.f32 %v1391, %v1660
  %v1662 = vpop.f32.mrb[0].mxu0
  %1663 = vmatprep.mubr.f32.mxu0 0.0
  %1664 = vmatmul.mubr.f32.gmra.mrb[0].mxu0 %v1460
  %v1665 = vpop.f32.mrb[0].mxu0
  %v1666 = vadd.f32 %v1391, %v1665
  %v1667 = vpop.f32.mrb[0].mxu0
  %1668 = vmatprep.mubr.f32.mxu0 0.0
  %1669 = vmatmul.mubr.f32.gmra.mrb[0].mxu0 %v1463
  %v1670 = vpop.f32.mrb[0].mxu0
  %v1671 = vadd.f32 %v1391, %v1670
  %v1672 = vpop.f32.mrb[0].mxu0
  %1673 = vmatprep.mubr.f32.mxu0 0.0
  %1674 = vmatmul.mubr.f32.gmra.mrb[0].mxu0 %v1466
  %v1675 = vpop.f32.mrb[0].mxu0
  %v1676 = vadd.f32 %v1391, %v1675
  %v1677 = vpop.f32.mrb[0].mxu0
  %1678 = vmatprep.mubr.f32.mxu0 0.0
  %1679 = vmatmul.mubr.f32.gmra.mrb[0].mxu0 %v1469
  %v1680 = vpop.f32.mrb[0].mxu0
  %v1681 = vadd.f32 %v1391, %v1680
  %v1682 = vpop.f32.mrb[0].mxu0
  %1683 = vmatprep.mubr.f32.mxu0 0.0
  %1684 = vmatmul.mubr.f32.gmra.mrb[0].mxu0 %v1472
  %v1685 = vpop.f32.mrb[0].mxu0
  %v1686 = vadd.f32 %v1391, %v1685
  %v1687 = vpop.f32.mrb[0].mxu0
  %1688 = vmatprep.mubr.f32.mxu0 0.0
  %1689 = vmatmul.mubr.f32.gmra.mrb[0].mxu0 %v1475
  %v1690 = vpop.f32.mrb[0].mxu0
  %v1691 = vadd.f32 %v1391, %v1690
  %v1692 = vpop.f32.mrb[0].mxu0
  %1693 = vmatprep.mubr.f32.mxu0 0.0
  %1694 = vmatmul.mubr.f32.gmra.mrb[0].mxu0 %v1478
  %v1695 = vpop.f32.mrb[0].mxu0
  %v1696 = vadd.f32 %v1391, %v1695
  %v1697 = vpop.f32.mrb[0].mxu0
  %1698 = vmatprep.mubr.f32.mxu0 0.0
  %1699 = vmatmul.mubr.f32.gmra.mrb[0].mxu0 %v1481
  %v1700 = vpop.f32.mrb[0].mxu0
  %v1701 = vadd.f32 %v1391, %v1700
  %v1702 = vpop.f32.mrb[0].mxu0
  %1703 = vmatprep.mubr.f32.mxu0 0.0
  %1704 = vmatmul.mubr.f32.gmra.mrb[0].mxu0 %v1484
  %v1705 = vpop.f32.mrb[0].mxu0
  %v1706 = vadd.f32 %v1391, %v1705
  %v1707 = vpop.f32.mrb[0].mxu0
  %1708 = vmatprep.mubr.f32.mxu0 0.0
  %1709 = vmatmul.mubr.f32.gmra.mrb[0].mxu0 %v1487
  %v1710 = vpop.f32.mrb[0].mxu0
  %v1711 = vadd.f32 %v1391, %v1710
  %v1712 = vpop.f32.mrb[0].mxu0
  %1713 = vdwg.mxu0
  %v1714 = vtanh.pop %v1556
  %v1715 = vtanh.pop %v1561
  %v1716 = vtanh.pop %v1566
  %v1717 = vtanh.pop %v1571
  %v1718 = vtanh.pop %v1576
  %v1719 = vtanh.pop %v1581
  %v1720 = vtanh.pop %v1586
  %v1721 = vtanh.pop %v1591
  %v1722 = vtanh.pop %v1596
  %v1723 = vtanh.pop %v1601
  %v1724 = vtanh.pop %v1606
  %v1725 = vtanh.pop %v1611
  %v1726 = vtanh.pop %v1616
  %v1727 = vtanh.pop %v1621
  %v1728 = vtanh.pop %v1626
  %v1729 = vtanh.pop %v1631
  %v1730 = vtanh.pop %v1636
  %v1731 = vtanh.pop %v1641
  %v1732 = vtanh.pop %v1646
  %v1733 = vtanh.pop %v1651
  %v1734 = vtanh.pop %v1656
  %v1735 = vtanh.pop %v1661
  %v1736 = vtanh.pop %v1666
  %v1737 = vtanh.pop %v1671
  %v1738 = vtanh.pop %v1676
  %v1739 = vtanh.pop %v1681
  %v1740 = vtanh.pop %v1686
  %v1741 = vtanh.pop %v1691
  %v1742 = vtanh.pop %v1696
  %v1743 = vtanh.pop %v1701
  %v1744 = vtanh.pop %v1706
  %v1745 = vtanh.pop %v1711
  %s1746 = scalar_lea.vmem %s5, 16
  %v1747 = vld [vmem:[%s1746] sm:$0xff]
  %v1748 = vld [vmem:[%s1746 + $0x8] sm:$0xff]
  %v1750 = vsel %vm788, %v1714, 0
  %v1753 = vsel %vm788, %v1715, 0
  %v1756 = vsel %vm788, %v1716, 0
  %v1759 = vsel %vm788, %v1717, 0
  %v1762 = vsel %vm788, %v1718, 0
  %v1765 = vsel %vm788, %v1719, 0
  %v1768 = vsel %vm788, %v1720, 0
  %v1771 = vsel %vm788, %v1721, 0
  %v1774 = vsel %vm788, %v1722, 0
  %v1777 = vsel %vm788, %v1723, 0
  %v1780 = vsel %vm788, %v1724, 0
  %v1783 = vsel %vm788, %v1725, 0
  %v1786 = vsel %vm788, %v1726, 0
  %v1789 = vsel %vm788, %v1727, 0
  %v1792 = vsel %vm788, %v1728, 0
  %v1795 = vsel %vm788, %v1729, 0
  %v1798 = vsel %vm788, %v1730, 0
  %v1801 = vsel %vm788, %v1731, 0
  %v1804 = vsel %vm788, %v1732, 0
  %v1807 = vsel %vm788, %v1733, 0
  %v1810 = vsel %vm788, %v1734, 0
  %v1813 = vsel %vm788, %v1735, 0
  %v1816 = vsel %vm788, %v1736, 0
  %v1819 = vsel %vm788, %v1737, 0
  %v1822 = vsel %vm788, %v1738, 0
  %v1825 = vsel %vm788, %v1739, 0
  %v1828 = vsel %vm788, %v1740, 0
  %v1831 = vsel %vm788, %v1741, 0
  %v1834 = vsel %vm788, %v1742, 0
  %v1837 = vsel %vm788, %v1743, 0
  %v1840 = vsel %vm788, %v1744, 0
  %v1843 = vsel %vm788, %v1745, 0
  %1845 = vmatprep.subr.mxu0 0.0
  %1846 = vmatpush1.msra.mxu0 %v1747
  %1847 = vmatprep.subr.mxu0 0.0
  %1848 = vmatpush1.msra.mxu0 %v1748
  %1849 = vmatprep.subr.mxu0 0.0
  %1850 = vmatpush1.msra.mxu0 0.0
  %1851 = vmatprep.subr.mxu0 0.0
  %1852 = vmatpush1.msra.mxu0 0.0
  %1853 = vmatprep.subr.mxu0 0.0
  %1854 = vmatpush1.msra.mxu0 0.0
  %1855 = vmatprep.subr.mxu0 0.0
  %1856 = vmatpush1.msra.mxu0 0.0
  %1857 = vmatprep.subr.mxu0 0.0
  %1858 = vmatpush1.msra.mxu0 0.0
  %1859 = vmatprep.subr.mxu0 0.0
  %1860 = vmatpush1.msra.mxu0 0.0
  %1861 = vmatprep.subr.mxu0 0.0
  %1862 = vmatpush1.msra.mxu0 0.0
  %1863 = vmatprep.subr.mxu0 0.0
  %1864 = vmatpush1.msra.mxu0 0.0
  %1865 = vmatprep.subr.mxu0 0.0
  %1866 = vmatpush1.msra.mxu0 0.0
  %1867 = vmatprep.subr.mxu0 0.0
  %1868 = vmatpush1.msra.mxu0 0.0
  %1869 = vmatprep.subr.mxu0 0.0
  %1870 = vmatpush1.msra.mxu0 0.0
  %1871 = vmatprep.subr.mxu0 0.0
  %1872 = vmatpush1.msra.mxu0 0.0
  %1873 = vmatprep.subr.mxu0 0.0
  %1874 = vmatpush1.msra.mxu0 0.0
  %1875 = vmatprep.subr.mxu0 0.0
  %1876 = vmatpush1.msra.mxu0 0.0
  %1877 = vmatprep.subr.mxu0 0.0
  %1878 = vmatpush1.msra.mxu0 0.0
  %1879 = vmatprep.subr.mxu0 0.0
  %1880 = vmatpush1.msra.mxu0 0.0
  %1881 = vmatprep.subr.mxu0 0.0
  %1882 = vmatpush1.msra.mxu0 0.0
  %1883 = vmatprep.subr.mxu0 0.0
  %1884 = vmatpush1.msra.mxu0 0.0
  %1885 = vmatprep.subr.mxu0 0.0
  %1886 = vmatpush1.msra.mxu0 0.0
  %1887 = vmatprep.subr.mxu0 0.0
  %1888 = vmatpush1.msra.mxu0 0.0
  %1889 = vmatprep.subr.mxu0 0.0
  %1890 = vmatpush1.msra.mxu0 0.0
  %1891 = vmatprep.subr.mxu0 0.0
  %1892 = vmatpush1.msra.mxu0 0.0
  %1893 = vmatprep.subr.mxu0 0.0
  %1894 = vmatpush1.msra.mxu0 0.0
  %1895 = vmatprep.subr.mxu0 0.0
  %1896 = vmatpush1.msra.mxu0 0.0
  %1897 = vmatprep.subr.mxu0 0.0
  %1898 = vmatpush1.msra.mxu0 0.0
  %1899 = vmatprep.subr.mxu0 0.0
  %1900 = vmatpush1.msra.mxu0 0.0
  %1901 = vmatprep.subr.mxu0 0.0
  %1902 = vmatpush1.msra.mxu0 0.0
  %1903 = vmatprep.subr.mxu0 0.0
  %1904 = vmatpush1.msra.mxu0 0.0
  %1905 = vmatprep.subr.mxu0 0.0
  %1906 = vmatpush1.msra.mxu0 0.0
  %1907 = vmatprep.subr.mxu0 0.0
  %1908 = vmatpush1.msra.mxu0 0.0
  %1909 = vmatprep.mubr.f32.mxu0 0.0
  %1910 = vmatmul.mubr.f32.gmra.mrb[0].mxu0 %v1750
  %v1911 = vpop.f32.mrb[0].mxu0
  %v1912 = vadd.f32 0.0, %v1911
  %v1913 = vpop.f32.mrb[0].mxu0
  %1914 = vmatprep.mubr.f32.mxu0 0.0
  %1915 = vmatmul.mubr.f32.gmra.mrb[0].mxu0 %v1753
  %v1916 = vpop.f32.mrb[0].mxu0
  %v1917 = vadd.f32 0.0, %v1916
  %v1918 = vpop.f32.mrb[0].mxu0
  %1919 = vmatprep.mubr.f32.mxu0 0.0
  %1920 = vmatmul.mubr.f32.gmra.mrb[0].mxu0 %v1756
  %v1921 = vpop.f32.mrb[0].mxu0
  %v1922 = vadd.f32 0.0, %v1921
  %v1923 = vpop.f32.mrb[0].mxu0
  %1924 = vmatprep.mubr.f32.mxu0 0.0
  %1925 = vmatmul.mubr.f32.gmra.mrb[0].mxu0 %v1759
  %v1926 = vpop.f32.mrb[0].mxu0
  %v1927 = vadd.f32 0.0, %v1926
  %v1928 = vpop.f32.mrb[0].mxu0
  %1929 = vmatprep.mubr.f32.mxu0 0.0
  %1930 = vmatmul.mubr.f32.gmra.mrb[0].mxu0 %v1762
  %v1931 = vpop.f32.mrb[0].mxu0
  %v1932 = vadd.f32 0.0, %v1931
  %v1933 = vpop.f32.mrb[0].mxu0
  %1934 = vmatprep.mubr.f32.mxu0 0.0
  %1935 = vmatmul.mubr.f32.gmra.mrb[0].mxu0 %v1765
  %v1936 = vpop.f32.mrb[0].mxu0
  %v1937 = vadd.f32 0.0, %v1936
  %v1938 = vpop.f32.mrb[0].mxu0
  %1939 = vmatprep.mubr.f32.mxu0 0.0
  %1940 = vmatmul.mubr.f32.gmra.mrb[0].mxu0 %v1768
  %v1941 = vpop.f32.mrb[0].mxu0
  %v1942 = vadd.f32 0.0, %v1941
  %v1943 = vpop.f32.mrb[0].mxu0
  %1944 = vmatprep.mubr.f32.mxu0 0.0
  %1945 = vmatmul.mubr.f32.gmra.mrb[0].mxu0 %v1771
  %v1946 = vpop.f32.mrb[0].mxu0
  %v1947 = vadd.f32 0.0, %v1946
  %v1948 = vpop.f32.mrb[0].mxu0
  %1949 = vmatprep.mubr.f32.mxu0 0.0
  %1950 = vmatmul.mubr.f32.gmra.mrb[0].mxu0 %v1774
  %v1951 = vpop.f32.mrb[0].mxu0
  %v1952 = vadd.f32 0.0, %v1951
  %v1953 = vpop.f32.mrb[0].mxu0
  %1954 = vmatprep.mubr.f32.mxu0 0.0
  %1955 = vmatmul.mubr.f32.gmra.mrb[0].mxu0 %v1777
  %v1956 = vpop.f32.mrb[0].mxu0
  %v1957 = vadd.f32 0.0, %v1956
  %v1958 = vpop.f32.mrb[0].mxu0
  %1959 = vmatprep.mubr.f32.mxu0 0.0
  %1960 = vmatmul.mubr.f32.gmra.mrb[0].mxu0 %v1780
  %v1961 = vpop.f32.mrb[0].mxu0
  %v1962 = vadd.f32 0.0, %v1961
  %v1963 = vpop.f32.mrb[0].mxu0
  %1964 = vmatprep.mubr.f32.mxu0 0.0
  %1965 = vmatmul.mubr.f32.gmra.mrb[0].mxu0 %v1783
  %v1966 = vpop.f32.mrb[0].mxu0
  %v1967 = vadd.f32 0.0, %v1966
  %v1968 = vpop.f32.mrb[0].mxu0
  %1969 = vmatprep.mubr.f32.mxu0 0.0
  %1970 = vmatmul.mubr.f32.gmra.mrb[0].mxu0 %v1786
  %v1971 = vpop.f32.mrb[0].mxu0
  %v1972 = vadd.f32 0.0, %v1971
  %v1973 = vpop.f32.mrb[0].mxu0
  %1974 = vmatprep.mubr.f32.mxu0 0.0
  %1975 = vmatmul.mubr.f32.gmra.mrb[0].mxu0 %v1789
  %v1976 = vpop.f32.mrb[0].mxu0
  %v1977 = vadd.f32 0.0, %v1976
  %v1978 = vpop.f32.mrb[0].mxu0
  %1979 = vmatprep.mubr.f32.mxu0 0.0
  %1980 = vmatmul.mubr.f32.gmra.mrb[0].mxu0 %v1792
  %v1981 = vpop.f32.mrb[0].mxu0
  %v1982 = vadd.f32 0.0, %v1981
  %v1983 = vpop.f32.mrb[0].mxu0
  %1984 = vmatprep.mubr.f32.mxu0 0.0
  %1985 = vmatmul.mubr.f32.gmra.mrb[0].mxu0 %v1795
  %v1986 = vpop.f32.mrb[0].mxu0
  %v1987 = vadd.f32 0.0, %v1986
  %v1988 = vpop.f32.mrb[0].mxu0
  %1989 = vmatprep.mubr.f32.mxu0 0.0
  %1990 = vmatmul.mubr.f32.gmra.mrb[0].mxu0 %v1798
  %v1991 = vpop.f32.mrb[0].mxu0
  %v1992 = vadd.f32 0.0, %v1991
  %v1993 = vpop.f32.mrb[0].mxu0
  %1994 = vmatprep.mubr.f32.mxu0 0.0
  %1995 = vmatmul.mubr.f32.gmra.mrb[0].mxu0 %v1801
  %v1996 = vpop.f32.mrb[0].mxu0
  %v1997 = vadd.f32 0.0, %v1996
  %v1998 = vpop.f32.mrb[0].mxu0
  %1999 = vmatprep.mubr.f32.mxu0 0.0
  %2000 = vmatmul.mubr.f32.gmra.mrb[0].mxu0 %v1804
  %v2001 = vpop.f32.mrb[0].mxu0
  %v2002 = vadd.f32 0.0, %v2001
  %v2003 = vpop.f32.mrb[0].mxu0
  %2004 = vmatprep.mubr.f32.mxu0 0.0
  %2005 = vmatmul.mubr.f32.gmra.mrb[0].mxu0 %v1807
  %v2006 = vpop.f32.mrb[0].mxu0
  %v2007 = vadd.f32 0.0, %v2006
  %v2008 = vpop.f32.mrb[0].mxu0
  %2009 = vmatprep.mubr.f32.mxu0 0.0
  %2010 = vmatmul.mubr.f32.gmra.mrb[0].mxu0 %v1810
  %v2011 = vpop.f32.mrb[0].mxu0
  %v2012 = vadd.f32 0.0, %v2011
  %v2013 = vpop.f32.mrb[0].mxu0
  %2014 = vmatprep.mubr.f32.mxu0 0.0
  %2015 = vmatmul.mubr.f32.gmra.mrb[0].mxu0 %v1813
  %v2016 = vpop.f32.mrb[0].mxu0
  %v2017 = vadd.f32 0.0, %v2016
  %v2018 = vpop.f32.mrb[0].mxu0
  %2019 = vmatprep.mubr.f32.mxu0 0.0
  %2020 = vmatmul.mubr.f32.gmra.mrb[0].mxu0 %v1816
  %v2021 = vpop.f32.mrb[0].mxu0
  %v2022 = vadd.f32 0.0, %v2021
  %v2023 = vpop.f32.mrb[0].mxu0
  %2024 = vmatprep.mubr.f32.mxu0 0.0
  %2025 = vmatmul.mubr.f32.gmra.mrb[0].mxu0 %v1819
  %v2026 = vpop.f32.mrb[0].mxu0
  %v2027 = vadd.f32 0.0, %v2026
  %v2028 = vpop.f32.mrb[0].mxu0
  %2029 = vmatprep.mubr.f32.mxu0 0.0
  %2030 = vmatmul.mubr.f32.gmra.mrb[0].mxu0 %v1822
  %v2031 = vpop.f32.mrb[0].mxu0
  %v2032 = vadd.f32 0.0, %v2031
  %v2033 = vpop.f32.mrb[0].mxu0
  %2034 = vmatprep.mubr.f32.mxu0 0.0
  %2035 = vmatmul.mubr.f32.gmra.mrb[0].mxu0 %v1825
  %v2036 = vpop.f32.mrb[0].mxu0
  %v2037 = vadd.f32 0.0, %v2036
  %v2038 = vpop.f32.mrb[0].mxu0
  %2039 = vmatprep.mubr.f32.mxu0 0.0
  %2040 = vmatmul.mubr.f32.gmra.mrb[0].mxu0 %v1828
  %v2041 = vpop.f32.mrb[0].mxu0
  %v2042 = vadd.f32 0.0, %v2041
  %v2043 = vpop.f32.mrb[0].mxu0
  %2044 = vmatprep.mubr.f32.mxu0 0.0
  %2045 = vmatmul.mubr.f32.gmra.mrb[0].mxu0 %v1831
  %v2046 = vpop.f32.mrb[0].mxu0
  %v2047 = vadd.f32 0.0, %v2046
  %v2048 = vpop.f32.mrb[0].mxu0
  %2049 = vmatprep.mubr.f32.mxu0 0.0
  %2050 = vmatmul.mubr.f32.gmra.mrb[0].mxu0 %v1834
  %v2051 = vpop.f32.mrb[0].mxu0
  %v2052 = vadd.f32 0.0, %v2051
  %v2053 = vpop.f32.mrb[0].mxu0
  %2054 = vmatprep.mubr.f32.mxu0 0.0
  %2055 = vmatmul.mubr.f32.gmra.mrb[0].mxu0 %v1837
  %v2056 = vpop.f32.mrb[0].mxu0
  %v2057 = vadd.f32 0.0, %v2056
  %v2058 = vpop.f32.mrb[0].mxu0
  %2059 = vmatprep.mubr.f32.mxu0 0.0
  %2060 = vmatmul.mubr.f32.gmra.mrb[0].mxu0 %v1840
  %v2061 = vpop.f32.mrb[0].mxu0
  %v2062 = vadd.f32 0.0, %v2061
  %v2063 = vpop.f32.mrb[0].mxu0
  %2064 = vmatprep.mubr.f32.mxu0 0.0
  %2065 = vmatmul.mubr.f32.gmra.mrb[0].mxu0 %v1843
  %v2066 = vpop.f32.mrb[0].mxu0
  %v2067 = vadd.f32 0.0, %v2066
  %v2068 = vpop.f32.mrb[0].mxu0
  %2069 = vdwg.mxu0
  %2070 = vrot.lane.b32.xlu0 %v1714, 16
  %v2071 = vpop.permute.xlu0 %2070
  %2072 = vrot.lane.b32.xlu0 %v1715, 16
  %v2073 = vpop.permute.xlu0 %2072
  %2074 = vrot.lane.b32.xlu0 %v1716, 16
  %v2075 = vpop.permute.xlu0 %2074
  %2076 = vrot.lane.b32.xlu0 %v1717, 16
  %v2077 = vpop.permute.xlu0 %2076
  %2078 = vrot.lane.b32.xlu0 %v1718, 16
  %v2079 = vpop.permute.xlu0 %2078
  %2080 = vrot.lane.b32.xlu0 %v1719, 16
  %v2081 = vpop.permute.xlu0 %2080
  %2082 = vrot.lane.b32.xlu0 %v1720, 16
  %v2083 = vpop.permute.xlu0 %2082
  %2084 = vrot.lane.b32.xlu0 %v1721, 16
  %v2085 = vpop.permute.xlu0 %2084
  %2086 = vrot.lane.b32.xlu0 %v1722, 16
  %v2087 = vpop.permute.xlu0 %2086
  %2088 = vrot.lane.b32.xlu0 %v1723, 16
  %v2089 = vpop.permute.xlu0 %2088
  %2090 = vrot.lane.b32.xlu0 %v1724, 16
  %v2091 = vpop.permute.xlu0 %2090
  %2092 = vrot.lane.b32.xlu0 %v1725, 16
  %v2093 = vpop.permute.xlu0 %2092
  %2094 = vrot.lane.b32.xlu0 %v1726, 16
  %v2095 = vpop.permute.xlu0 %2094
  %2096 = vrot.lane.b32.xlu0 %v1727, 16
  %v2097 = vpop.permute.xlu0 %2096
  %2098 = vrot.lane.b32.xlu0 %v1728, 16
  %v2099 = vpop.permute.xlu0 %2098
  %2100 = vrot.lane.b32.xlu0 %v1729, 16
  %v2101 = vpop.permute.xlu0 %2100
  %2102 = vrot.lane.b32.xlu0 %v1730, 16
  %v2103 = vpop.permute.xlu0 %2102
  %2104 = vrot.lane.b32.xlu0 %v1731, 16
  %v2105 = vpop.permute.xlu0 %2104
  %2106 = vrot.lane.b32.xlu0 %v1732, 16
  %v2107 = vpop.permute.xlu0 %2106
  %2108 = vrot.lane.b32.xlu0 %v1733, 16
  %v2109 = vpop.permute.xlu0 %2108
  %2110 = vrot.lane.b32.xlu0 %v1734, 16
  %v2111 = vpop.permute.xlu0 %2110
  %2112 = vrot.lane.b32.xlu0 %v1735, 16
  %v2113 = vpop.permute.xlu0 %2112
  %2114 = vrot.lane.b32.xlu0 %v1736, 16
  %v2115 = vpop.permute.xlu0 %2114
  %2116 = vrot.lane.b32.xlu0 %v1737, 16
  %v2117 = vpop.permute.xlu0 %2116
  %2118 = vrot.lane.b32.xlu0 %v1738, 16
  %v2119 = vpop.permute.xlu0 %2118
  %2120 = vrot.lane.b32.xlu0 %v1739, 16
  %v2121 = vpop.permute.xlu0 %2120
  %2122 = vrot.lane.b32.xlu0 %v1740, 16
  %v2123 = vpop.permute.xlu0 %2122
  %2124 = vrot.lane.b32.xlu0 %v1741, 16
  %v2125 = vpop.permute.xlu0 %2124
  %2126 = vrot.lane.b32.xlu0 %v1742, 16
  %v2127 = vpop.permute.xlu0 %2126
  %2128 = vrot.lane.b32.xlu0 %v1743, 16
  %v2129 = vpop.permute.xlu0 %2128
  %2130 = vrot.lane.b32.xlu0 %v1744, 16
  %v2131 = vpop.permute.xlu0 %2130
  %2132 = vrot.lane.b32.xlu0 %v1745, 16
  %v2133 = vpop.permute.xlu0 %2132
  %v2166 = vsel %vm788, %v754, %v2071
  %v2167 = vsel %vm788, %v755, %v2073
  %v2168 = vsel %vm788, %v756, %v2075
  %v2169 = vsel %vm788, %v757, %v2077
  %v2170 = vsel %vm788, %v758, %v2079
  %v2171 = vsel %vm788, %v759, %v2081
  %v2172 = vsel %vm788, %v760, %v2083
  %v2173 = vsel %vm788, %v761, %v2085
  %v2174 = vsel %vm788, %v762, %v2087
  %v2175 = vsel %vm788, %v763, %v2089
  %v2176 = vsel %vm788, %v764, %v2091
  %v2177 = vsel %vm788, %v765, %v2093
  %v2178 = vsel %vm788, %v766, %v2095
  %v2179 = vsel %vm788, %v767, %v2097
  %v2180 = vsel %vm788, %v768, %v2099
  %v2181 = vsel %vm788, %v769, %v2101
  %v2182 = vsel %vm788, %v770, %v2103
  %v2183 = vsel %vm788, %v771, %v2105
  %v2184 = vsel %vm788, %v772, %v2107
  %v2185 = vsel %vm788, %v773, %v2109
  %v2186 = vsel %vm788, %v774, %v2111
  %v2187 = vsel %vm788, %v775, %v2113
  %v2188 = vsel %vm788, %v776, %v2115
  %v2189 = vsel %vm788, %v777, %v2117
  %v2190 = vsel %vm788, %v778, %v2119
  %v2191 = vsel %vm788, %v779, %v2121
  %v2192 = vsel %vm788, %v780, %v2123
  %v2193 = vsel %vm788, %v781, %v2125
  %v2194 = vsel %vm788, %v782, %v2127
  %v2195 = vsel %vm788, %v783, %v2129
  %v2196 = vsel %vm788, %v784, %v2131
  %v2197 = vsel %vm788, %v785, %v2133
  %v2198 = vpack.c.bf16 %v2167, %v2166
  %v2199 = vpack.c.bf16 %v2169, %v2168
  %v2200 = vpack.c.bf16 %v2171, %v2170
  %v2201 = vpack.c.bf16 %v2173, %v2172
  %v2202 = vpack.c.bf16 %v2175, %v2174
  %v2203 = vpack.c.bf16 %v2177, %v2176
  %v2204 = vpack.c.bf16 %v2179, %v2178
  %v2205 = vpack.c.bf16 %v2181, %v2180
  %v2206 = vpack.c.bf16 %v2183, %v2182
  %v2207 = vpack.c.bf16 %v2185, %v2184
  %v2208 = vpack.c.bf16 %v2187, %v2186
  %v2209 = vpack.c.bf16 %v2189, %v2188
  %v2210 = vpack.c.bf16 %v2191, %v2190
  %v2211 = vpack.c.bf16 %v2193, %v2192
  %v2212 = vpack.c.bf16 %v2195, %v2194
  %v2213 = vpack.c.bf16 %v2197, %v2196
  %v2230 = vunpack.c.l.b16 %v2198
  %v2231 = vunpack.c.h.b16 %v2198
  %v2232 = vunpack.c.l.b16 %v2199
  %v2233 = vunpack.c.h.b16 %v2199
  %v2234 = vunpack.c.l.b16 %v2200
  %v2235 = vunpack.c.h.b16 %v2200
  %v2236 = vunpack.c.l.b16 %v2201
  %v2237 = vunpack.c.h.b16 %v2201
  %v2238 = vunpack.c.l.b16 %v2202
  %v2239 = vunpack.c.h.b16 %v2202
  %v2240 = vunpack.c.l.b16 %v2203
  %v2241 = vunpack.c.h.b16 %v2203
  %v2242 = vunpack.c.l.b16 %v2204
  %v2243 = vunpack.c.h.b16 %v2204
  %v2244 = vunpack.c.l.b16 %v2205
  %v2245 = vunpack.c.h.b16 %v2205
  %v2246 = vunpack.c.l.b16 %v2206
  %v2247 = vunpack.c.h.b16 %v2206
  %v2248 = vunpack.c.l.b16 %v2207
  %v2249 = vunpack.c.h.b16 %v2207
  %v2250 = vunpack.c.l.b16 %v2208
  %v2251 = vunpack.c.h.b16 %v2208
  %v2252 = vunpack.c.l.b16 %v2209
  %v2253 = vunpack.c.h.b16 %v2209
  %v2254 = vunpack.c.l.b16 %v2210
  %v2255 = vunpack.c.h.b16 %v2210
  %v2256 = vunpack.c.l.b16 %v2211
  %v2257 = vunpack.c.h.b16 %v2211
  %v2258 = vunpack.c.l.b16 %v2212
  %v2259 = vunpack.c.h.b16 %v2212
  %v2260 = vunpack.c.l.b16 %v2213
  %v2261 = vunpack.c.h.b16 %v2213
  %v2262 = vpack.c.b16 %v2230, %v2230
  %v2263 = vpack.c.b16 %v2231, %v2231
  %v2264 = vpack.c.b16 %v2232, %v2232
  %v2265 = vpack.c.b16 %v2233, %v2233
  %v2266 = vpack.c.b16 %v2234, %v2234
  %v2267 = vpack.c.b16 %v2235, %v2235
  %v2268 = vpack.c.b16 %v2236, %v2236
  %v2269 = vpack.c.b16 %v2237, %v2237
  %v2270 = vpack.c.b16 %v2238, %v2238
  %v2271 = vpack.c.b16 %v2239, %v2239
  %v2272 = vpack.c.b16 %v2240, %v2240
  %v2273 = vpack.c.b16 %v2241, %v2241
  %v2274 = vpack.c.b16 %v2242, %v2242
  %v2275 = vpack.c.b16 %v2243, %v2243
  %v2276 = vpack.c.b16 %v2244, %v2244
  %v2277 = vpack.c.b16 %v2245, %v2245
  %v2278 = vpack.c.b16 %v2246, %v2246
  %v2279 = vpack.c.b16 %v2247, %v2247
  %v2280 = vpack.c.b16 %v2248, %v2248
  %v2281 = vpack.c.b16 %v2249, %v2249
  %v2282 = vpack.c.b16 %v2250, %v2250
  %v2283 = vpack.c.b16 %v2251, %v2251
  %v2284 = vpack.c.b16 %v2252, %v2252
  %v2285 = vpack.c.b16 %v2253, %v2253
  %v2286 = vpack.c.b16 %v2254, %v2254
  %v2287 = vpack.c.b16 %v2255, %v2255
  %v2288 = vpack.c.b16 %v2256, %v2256
  %v2289 = vpack.c.b16 %v2257, %v2257
  %v2290 = vpack.c.b16 %v2258, %v2258
  %v2291 = vpack.c.b16 %v2259, %v2259
  %v2292 = vpack.c.b16 %v2260, %v2260
  %v2293 = vpack.c.b16 %v2261, %v2261
  %vm2326 = vcmask 257024
  %2327 = vst.msk [vmem:[%s6] sm:$0xf] %vm2326, %v2262
  %2328 = vst.msk [vmem:[%s6 + $0x4] sm:$0xf] %vm2326, %v2263
  %2329 = vst.msk [vmem:[%s6 + $0x8] sm:$0xf] %vm2326, %v2264
  %2330 = vst.msk [vmem:[%s6 + $0xc] sm:$0xf] %vm2326, %v2265
  %2331 = vst.msk [vmem:[%s6 + $0x10] sm:$0xf] %vm2326, %v2266
  %2332 = vst.msk [vmem:[%s6 + $0x14] sm:$0xf] %vm2326, %v2267
  %2333 = vst.msk [vmem:[%s6 + $0x18] sm:$0xf] %vm2326, %v2268
  %2334 = vst.msk [vmem:[%s6 + $0x1c] sm:$0xf] %vm2326, %v2269
  %2335 = vst.msk [vmem:[%s6 + $0x20] sm:$0xf] %vm2326, %v2270
  %2336 = vst.msk [vmem:[%s6 + $0x24] sm:$0xf] %vm2326, %v2271
  %2337 = vst.msk [vmem:[%s6 + $0x28] sm:$0xf] %vm2326, %v2272
  %2338 = vst.msk [vmem:[%s6 + $0x2c] sm:$0xf] %vm2326, %v2273
  %2339 = vst.msk [vmem:[%s6 + $0x30] sm:$0xf] %vm2326, %v2274
  %2340 = vst.msk [vmem:[%s6 + $0x34] sm:$0xf] %vm2326, %v2275
  %2341 = vst.msk [vmem:[%s6 + $0x38] sm:$0xf] %vm2326, %v2276
  %2342 = vst.msk [vmem:[%s6 + $0x3c] sm:$0xf] %vm2326, %v2277
  %2343 = vst.msk [vmem:[%s6 + $0x40] sm:$0xf] %vm2326, %v2278
  %2344 = vst.msk [vmem:[%s6 + $0x44] sm:$0xf] %vm2326, %v2279
  %2345 = vst.msk [vmem:[%s6 + $0x48] sm:$0xf] %vm2326, %v2280
  %2346 = vst.msk [vmem:[%s6 + $0x4c] sm:$0xf] %vm2326, %v2281
  %2347 = vst.msk [vmem:[%s6 + $0x50] sm:$0xf] %vm2326, %v2282
  %2348 = vst.msk [vmem:[%s6 + $0x54] sm:$0xf] %vm2326, %v2283
  %2349 = vst.msk [vmem:[%s6 + $0x58] sm:$0xf] %vm2326, %v2284
  %2350 = vst.msk [vmem:[%s6 + $0x5c] sm:$0xf] %vm2326, %v2285
  %2351 = vst.msk [vmem:[%s6 + $0x60] sm:$0xf] %vm2326, %v2286
  %2352 = vst.msk [vmem:[%s6 + $0x64] sm:$0xf] %vm2326, %v2287
  %2353 = vst.msk [vmem:[%s6 + $0x68] sm:$0xf] %vm2326, %v2288
  %2354 = vst.msk [vmem:[%s6 + $0x6c] sm:$0xf] %vm2326, %v2289
  %2355 = vst.msk [vmem:[%s6 + $0x70] sm:$0xf] %vm2326, %v2290
  %2356 = vst.msk [vmem:[%s6 + $0x74] sm:$0xf] %vm2326, %v2291
  %2357 = vst.msk [vmem:[%s6 + $0x78] sm:$0xf] %vm2326, %v2292
  %2358 = vst.msk [vmem:[%s6 + $0x7c] sm:$0xf] %vm2326, %v2293
  %2391 = vrot.lane.b32.xlu0 %v1912, 16
  %v2392 = vpop.permute.xlu0 %2391
  %2393 = vrot.lane.b32.xlu0 %v1917, 16
  %v2394 = vpop.permute.xlu0 %2393
  %2395 = vrot.lane.b32.xlu0 %v1922, 16
  %v2396 = vpop.permute.xlu0 %2395
  %2397 = vrot.lane.b32.xlu0 %v1927, 16
  %v2398 = vpop.permute.xlu0 %2397
  %2399 = vrot.lane.b32.xlu0 %v1932, 16
  %v2400 = vpop.permute.xlu0 %2399
  %2401 = vrot.lane.b32.xlu0 %v1937, 16
  %v2402 = vpop.permute.xlu0 %2401
  %2403 = vrot.lane.b32.xlu0 %v1942, 16
  %v2404 = vpop.permute.xlu0 %2403
  %2405 = vrot.lane.b32.xlu0 %v1947, 16
  %v2406 = vpop.permute.xlu0 %2405
  %2407 = vrot.lane.b32.xlu0 %v1952, 16
  %v2408 = vpop.permute.xlu0 %2407
  %2409 = vrot.lane.b32.xlu0 %v1957, 16
  %v2410 = vpop.permute.xlu0 %2409
  %2411 = vrot.lane.b32.xlu0 %v1962, 16
  %v2412 = vpop.permute.xlu0 %2411
  %2413 = vrot.lane.b32.xlu0 %v1967, 16
  %v2414 = vpop.permute.xlu0 %2413
  %2415 = vrot.lane.b32.xlu0 %v1972, 16
  %v2416 = vpop.permute.xlu0 %2415
  %2417 = vrot.lane.b32.xlu0 %v1977, 16
  %v2418 = vpop.permute.xlu0 %2417
  %2419 = vrot.lane.b32.xlu0 %v1982, 16
  %v2420 = vpop.permute.xlu0 %2419
  %2421 = vrot.lane.b32.xlu0 %v1987, 16
  %v2422 = vpop.permute.xlu0 %2421
  %2423 = vrot.lane.b32.xlu0 %v1992, 16
  %v2424 = vpop.permute.xlu0 %2423
  %2425 = vrot.lane.b32.xlu0 %v1997, 16
  %v2426 = vpop.permute.xlu0 %2425
  %2427 = vrot.lane.b32.xlu0 %v2002, 16
  %v2428 = vpop.permute.xlu0 %2427
  %2429 = vrot.lane.b32.xlu0 %v2007, 16
  %v2430 = vpop.permute.xlu0 %2429
  %2431 = vrot.lane.b32.xlu0 %v2012, 16
  %v2432 = vpop.permute.xlu0 %2431
  %2433 = vrot.lane.b32.xlu0 %v2017, 16
  %v2434 = vpop.permute.xlu0 %2433
  %2435 = vrot.lane.b32.xlu0 %v2022, 16
  %v2436 = vpop.permute.xlu0 %2435
  %2437 = vrot.lane.b32.xlu0 %v2027, 16
  %v2438 = vpop.permute.xlu0 %2437
  %2439 = vrot.lane.b32.xlu0 %v2032, 16
  %v2440 = vpop.permute.xlu0 %2439
  %2441 = vrot.lane.b32.xlu0 %v2037, 16
  %v2442 = vpop.permute.xlu0 %2441
  %2443 = vrot.lane.b32.xlu0 %v2042, 16
  %v2444 = vpop.permute.xlu0 %2443
  %2445 = vrot.lane.b32.xlu0 %v2047, 16
  %v2446 = vpop.permute.xlu0 %2445
  %2447 = vrot.lane.b32.xlu0 %v2052, 16
  %v2448 = vpop.permute.xlu0 %2447
  %2449 = vrot.lane.b32.xlu0 %v2057, 16
  %v2450 = vpop.permute.xlu0 %2449
  %2451 = vrot.lane.b32.xlu0 %v2062, 16
  %v2452 = vpop.permute.xlu0 %2451
  %2453 = vrot.lane.b32.xlu0 %v2067, 16
  %v2454 = vpop.permute.xlu0 %2453
  %v2487 = vsel %vm788, %v952, %v2392
  %v2488 = vsel %vm788, %v957, %v2394
  %v2489 = vsel %vm788, %v962, %v2396
  %v2490 = vsel %vm788, %v967, %v2398
  %v2491 = vsel %vm788, %v972, %v2400
  %v2492 = vsel %vm788, %v977, %v2402
  %v2493 = vsel %vm788, %v982, %v2404
  %v2494 = vsel %vm788, %v987, %v2406
  %v2495 = vsel %vm788, %v992, %v2408
  %v2496 = vsel %vm788, %v997, %v2410
  %v2497 = vsel %vm788, %v1002, %v2412
  %v2498 = vsel %vm788, %v1007, %v2414
  %v2499 = vsel %vm788, %v1012, %v2416
  %v2500 = vsel %vm788, %v1017, %v2418
  %v2501 = vsel %vm788, %v1022, %v2420
  %v2502 = vsel %vm788, %v1027, %v2422
  %v2503 = vsel %vm788, %v1032, %v2424
  %v2504 = vsel %vm788, %v1037, %v2426
  %v2505 = vsel %vm788, %v1042, %v2428
  %v2506 = vsel %vm788, %v1047, %v2430
  %v2507 = vsel %vm788, %v1052, %v2432
  %v2508 = vsel %vm788, %v1057, %v2434
  %v2509 = vsel %vm788, %v1062, %v2436
  %v2510 = vsel %vm788, %v1067, %v2438
  %v2511 = vsel %vm788, %v1072, %v2440
  %v2512 = vsel %vm788, %v1077, %v2442
  %v2513 = vsel %vm788, %v1082, %v2444
  %v2514 = vsel %vm788, %v1087, %v2446
  %v2515 = vsel %vm788, %v1092, %v2448
  %v2516 = vsel %vm788, %v1097, %v2450
  %v2517 = vsel %vm788, %v1102, %v2452
  %v2518 = vsel %vm788, %v1107, %v2454
  %v2519 = vpack.c.bf16 %v2488, %v2487
  %v2520 = vpack.c.bf16 %v2490, %v2489
  %v2521 = vpack.c.bf16 %v2492, %v2491
  %v2522 = vpack.c.bf16 %v2494, %v2493
  %v2523 = vpack.c.bf16 %v2496, %v2495
  %v2524 = vpack.c.bf16 %v2498, %v2497
  %v2525 = vpack.c.bf16 %v2500, %v2499
  %v2526 = vpack.c.bf16 %v2502, %v2501
  %v2527 = vpack.c.bf16 %v2504, %v2503
  %v2528 = vpack.c.bf16 %v2506, %v2505
  %v2529 = vpack.c.bf16 %v2508, %v2507
  %v2530 = vpack.c.bf16 %v2510, %v2509
  %v2531 = vpack.c.bf16 %v2512, %v2511
  %v2532 = vpack.c.bf16 %v2514, %v2513
  %v2533 = vpack.c.bf16 %v2516, %v2515
  %v2534 = vpack.c.bf16 %v2518, %v2517
  %v2551 = vunpack.c.l.b16 %v2519
  %v2552 = vunpack.c.h.b16 %v2519
  %v2553 = vunpack.c.l.b16 %v2520
  %v2554 = vunpack.c.h.b16 %v2520
  %v2555 = vunpack.c.l.b16 %v2521
  %v2556 = vunpack.c.h.b16 %v2521
  %v2557 = vunpack.c.l.b16 %v2522
  %v2558 = vunpack.c.h.b16 %v2522
  %v2559 = vunpack.c.l.b16 %v2523
  %v2560 = vunpack.c.h.b16 %v2523
  %v2561 = vunpack.c.l.b16 %v2524
  %v2562 = vunpack.c.h.b16 %v2524
  %v2563 = vunpack.c.l.b16 %v2525
  %v2564 = vunpack.c.h.b16 %v2525
  %v2565 = vunpack.c.l.b16 %v2526
  %v2566 = vunpack.c.h.b16 %v2526
  %v2567 = vunpack.c.l.b16 %v2527
  %v2568 = vunpack.c.h.b16 %v2527
  %v2569 = vunpack.c.l.b16 %v2528
  %v2570 = vunpack.c.h.b16 %v2528
  %v2571 = vunpack.c.l.b16 %v2529
  %v2572 = vunpack.c.h.b16 %v2529
  %v2573 = vunpack.c.l.b16 %v2530
  %v2574 = vunpack.c.h.b16 %v2530
  %v2575 = vunpack.c.l.b16 %v2531
  %v2576 = vunpack.c.h.b16 %v2531
  %v2577 = vunpack.c.l.b16 %v2532
  %v2578 = vunpack.c.h.b16 %v2532
  %v2579 = vunpack.c.l.b16 %v2533
  %v2580 = vunpack.c.h.b16 %v2533
  %v2581 = vunpack.c.l.b16 %v2534
  %v2582 = vunpack.c.h.b16 %v2534
  %v2583 = vpack.c.b16 %v2551, %v2551
  %v2584 = vpack.c.b16 %v2552, %v2552
  %v2585 = vpack.c.b16 %v2553, %v2553
  %v2586 = vpack.c.b16 %v2554, %v2554
  %v2587 = vpack.c.b16 %v2555, %v2555
  %v2588 = vpack.c.b16 %v2556, %v2556
  %v2589 = vpack.c.b16 %v2557, %v2557
  %v2590 = vpack.c.b16 %v2558, %v2558
  %v2591 = vpack.c.b16 %v2559, %v2559
  %v2592 = vpack.c.b16 %v2560, %v2560
  %v2593 = vpack.c.b16 %v2561, %v2561
  %v2594 = vpack.c.b16 %v2562, %v2562
  %v2595 = vpack.c.b16 %v2563, %v2563
  %v2596 = vpack.c.b16 %v2564, %v2564
  %v2597 = vpack.c.b16 %v2565, %v2565
  %v2598 = vpack.c.b16 %v2566, %v2566
  %v2599 = vpack.c.b16 %v2567, %v2567
  %v2600 = vpack.c.b16 %v2568, %v2568
  %v2601 = vpack.c.b16 %v2569, %v2569
  %v2602 = vpack.c.b16 %v2570, %v2570
  %v2603 = vpack.c.b16 %v2571, %v2571
  %v2604 = vpack.c.b16 %v2572, %v2572
  %v2605 = vpack.c.b16 %v2573, %v2573
  %v2606 = vpack.c.b16 %v2574, %v2574
  %v2607 = vpack.c.b16 %v2575, %v2575
  %v2608 = vpack.c.b16 %v2576, %v2576
  %v2609 = vpack.c.b16 %v2577, %v2577
  %v2610 = vpack.c.b16 %v2578, %v2578
  %v2611 = vpack.c.b16 %v2579, %v2579
  %v2612 = vpack.c.b16 %v2580, %v2580
  %v2613 = vpack.c.b16 %v2581, %v2581
  %v2614 = vpack.c.b16 %v2582, %v2582
  %2647 = vst.msk [vmem:[%s7] sm:$0xf] %vm2326, %v2583
  %2648 = vst.msk [vmem:[%s7 + $0x4] sm:$0xf] %vm2326, %v2584
  %2649 = vst.msk [vmem:[%s7 + $0x8] sm:$0xf] %vm2326, %v2585
  %2650 = vst.msk [vmem:[%s7 + $0xc] sm:$0xf] %vm2326, %v2586
  %2651 = vst.msk [vmem:[%s7 + $0x10] sm:$0xf] %vm2326, %v2587
  %2652 = vst.msk [vmem:[%s7 + $0x14] sm:$0xf] %vm2326, %v2588
  %2653 = vst.msk [vmem:[%s7 + $0x18] sm:$0xf] %vm2326, %v2589
  %2654 = vst.msk [vmem:[%s7 + $0x1c] sm:$0xf] %vm2326, %v2590
  %2655 = vst.msk [vmem:[%s7 + $0x20] sm:$0xf] %vm2326, %v2591
  %2656 = vst.msk [vmem:[%s7 + $0x24] sm:$0xf] %vm2326, %v2592
  %2657 = vst.msk [vmem:[%s7 + $0x28] sm:$0xf] %vm2326, %v2593
  %2658 = vst.msk [vmem:[%s7 + $0x2c] sm:$0xf] %vm2326, %v2594
  %2659 = vst.msk [vmem:[%s7 + $0x30] sm:$0xf] %vm2326, %v2595
  %2660 = vst.msk [vmem:[%s7 + $0x34] sm:$0xf] %vm2326, %v2596
  %2661 = vst.msk [vmem:[%s7 + $0x38] sm:$0xf] %vm2326, %v2597
  %2662 = vst.msk [vmem:[%s7 + $0x3c] sm:$0xf] %vm2326, %v2598
  %2663 = vst.msk [vmem:[%s7 + $0x40] sm:$0xf] %vm2326, %v2599
  %2664 = vst.msk [vmem:[%s7 + $0x44] sm:$0xf] %vm2326, %v2600
  %2665 = vst.msk [vmem:[%s7 + $0x48] sm:$0xf] %vm2326, %v2601
  %2666 = vst.msk [vmem:[%s7 + $0x4c] sm:$0xf] %vm2326, %v2602
  %2667 = vst.msk [vmem:[%s7 + $0x50] sm:$0xf] %vm2326, %v2603
  %2668 = vst.msk [vmem:[%s7 + $0x54] sm:$0xf] %vm2326, %v2604
  %2669 = vst.msk [vmem:[%s7 + $0x58] sm:$0xf] %vm2326, %v2605
  %2670 = vst.msk [vmem:[%s7 + $0x5c] sm:$0xf] %vm2326, %v2606
  %2671 = vst.msk [vmem:[%s7 + $0x60] sm:$0xf] %vm2326, %v2607
  %2672 = vst.msk [vmem:[%s7 + $0x64] sm:$0xf] %vm2326, %v2608
  %2673 = vst.msk [vmem:[%s7 + $0x68] sm:$0xf] %vm2326, %v2609
  %2674 = vst.msk [vmem:[%s7 + $0x6c] sm:$0xf] %vm2326, %v2610
  %2675 = vst.msk [vmem:[%s7 + $0x70] sm:$0xf] %vm2326, %v2611
  %2676 = vst.msk [vmem:[%s7 + $0x74] sm:$0xf] %vm2326, %v2612
  %2677 = vst.msk [vmem:[%s7 + $0x78] sm:$0xf] %vm2326, %v2613
  %2678 = vst.msk [vmem:[%s7 + $0x7c] sm:$0xf] %vm2326, %v2614
  // Predicated region
  $region26: #{tpu_custom_call.1} parent=0 // pred_check
    _
  $region27: #{tpu_custom_call.1} parent=0 // pred_check_branch
    %2680 = sbr.rel (0) target = $region29
  $region28: #{tpu_custom_call.1} parent=0 // pred_region
    _
  $region29: #{tpu_custom_call.1} parent=0 // pred_fallthru
    _
  // Predicated region
  $region30: #{tpu_custom_call.1} parent=0 // pred_check
    _
  $region31: #{tpu_custom_call.1} parent=0 // pred_check_branch
    %2682 = sbr.rel (0) target = $region33
  $region32: #{tpu_custom_call.1} parent=0 // pred_region
    _
  $region33: #{tpu_custom_call.1} parent=0 // pred_fallthru
    _
  // Predicated region
  $region34: #{tpu_custom_call.1} parent=0 // pred_check
    _
  $region35: #{tpu_custom_call.1} parent=0 // pred_check_branch
    %2684 = sbr.rel (0) target = $region37
  $region36: #{tpu_custom_call.1} parent=0 // pred_region
    _
  $region37: #{tpu_custom_call.1} parent=0 // pred_fallthru
    _
  // Predicated region
  $region38: #{tpu_custom_call.1} parent=0 // pred_check
    _
  $region39: #{tpu_custom_call.1} parent=0 // pred_check_branch
    %2686 = sbr.rel (0) target = $region41
  $region40: #{tpu_custom_call.1} parent=0 // pred_region
    _
  $region41: #{tpu_custom_call.1} parent=0 // pred_fallthru
    _

</llo_original>
